<compile_context>
chip_gen: v6e
topology: v6e:2x2x1
jax: 0.10.0
libtpu: 0.0.40
codegen_flags: <defaults>
</compile_context>

<pallas_src>
import functools

import numpy as np
import jax
import jax.numpy as jnp
from jax.experimental import pallas as pl
from jax.experimental.pallas import tpu as pltpu


# ------------------------------ Pallas kernel -------------------------------

def _fused_prelu_conv_kernel(*refs, H, W, C, res_kinds, coeffs, emit_k):
    """PReLU -> 3x3 conv (single MXU matmul) -> bias -> scaled-residual epilogue.

    refs = (x_pad, alpha, w_packed, bias, *residuals, [k_out], combo_out)
      x_pad    : (1, H+2, W+2, C) f32, zero halo (pre-PReLU activation)
      alpha    : (1, 1, C)        f32 PReLU slopes
      w_packed : (9*C, C)         bf16, taps stacked along K (kh-major, kw-minor)
      bias     : (1, 1, C)        f32
      residual : (1, H+2, W+2, C) ("pad") or (1, H, W, C) ("full")
      k_out    : (1, H, W, C)     f32 conv output (only if emit_k)
      combo_out: (1, H+2, W+2, C) f32, written back with a zero halo
    combo = coeffs[0] * k + sum_i coeffs[i+1] * residual_i
    """
    n_arr = sum(1 for kind in res_kinds if kind != "self")
    x_ref, a_ref, w_ref, b_ref = refs[:4]
    res_refs = refs[4:4 + n_arr]
    out_refs = refs[4 + n_arr:]
    if emit_k:
        k_ref, combo_ref = out_refs
    else:
        (combo_ref,) = out_refs

    xp = x_ref[0]                                      # (H+2, W+2, C) f32
    alpha = a_ref[...]                                 # (1, 1, C)
    xa = jnp.where(xp > 0.0, xp, xp * alpha)           # fused PReLU (PReLU(0)=0)

    # im2col-along-K: 9 shifted taps -> (H*W, 9C) bf16 LHS, ONE MXU matmul.
    taps = []
    for kh in range(3):
        for kw in range(3):
            tap = xa[kh:kh + H, kw:kw + W, :]          # (H, W, C) f32
            taps.append(tap.reshape(H * W, C).astype(jnp.bfloat16))
    lhs = jnp.concatenate(taps, axis=-1)               # (H*W, 9C) bf16
    k = jnp.dot(lhs, w_ref[...], preferred_element_type=jnp.float32)
    k = k.reshape(H, W, C) + b_ref[...]                # (H, W, C) f32

    # fused linear-combination epilogue; coefficients are trace-time constants.
    combo = k if coeffs[0] == 1.0 else k * coeffs[0]
    ri = 0
    for i, kind in enumerate(res_kinds):
        if kind == "self":
            rv = xp[1:H + 1, 1:W + 1, :]               # pre-PReLU conv input
        elif kind == "pad":
            rv = res_refs[ri][0][1:H + 1, 1:W + 1, :]
            ri += 1
        else:                                          # "full"
            rv = res_refs[ri][0]
            ri += 1
        c = coeffs[i + 1]
        combo = combo + (rv if c == 1.0 else rv * c)

    if emit_k:
        k_ref[0] = k
    # write combo back zero-halo padded so it feeds the next conv directly
    combo_ref[...] = jnp.zeros_like(combo_ref)
    combo_ref[0, 1:H + 1, 1:W + 1, :] = combo


# ------------------------------ JAX wrappers --------------------------------

def _pack_conv_weight(w_oihw):
    """(Cout, Cin, 3, 3) PyTorch-style weights -> (9*Cin, Cout) bf16 K-stack."""
    rows = [w_oihw[:, :, kh, kw].T for kh in range(3) for kw in range(3)]
    return jnp.concatenate(rows, axis=0).astype(jnp.bfloat16)


def fused_prelu_conv(x_pad, alpha, w_packed, bias, residuals, coeffs, emit_k):
    """Fused PReLU -> Conv3x3(+bias) -> scaled-residual epilogue.

    x_pad     : (N, H+2, W+2, C) f32 with zero halo.
    residuals : list of (array_or_None, kind), kind in {"self", "pad", "full"}
                ("self" reuses the conv input itself, no extra HBM stream).
    coeffs    : (c_k, c_0, ..., c_{n-1}) Python floats (baked at trace time).
    Returns (k, combo_pad) if emit_k else combo_pad; combo_pad keeps the zero
    halo so it can feed the next conv with no jnp.pad round trip.
    """
    N, Hp, Wp, C = x_pad.shape
    H, W = Hp - 2, Wp - 2
    res_kinds = tuple(kind for _, kind in residuals)
    res_arrays = [arr for arr, kind in residuals if kind != "self"]
    assert len(coeffs) == len(res_kinds) + 1

    alpha3 = alpha.reshape(1, 1, C).astype(jnp.float32)
    bias3 = bias.reshape(1, 1, C).astype(jnp.float32)

    kernel = functools.partial(
        _fused_prelu_conv_kernel, H=H, W=W, C=C, res_kinds=res_kinds,
        coeffs=tuple(float(c) for c in coeffs), emit_k=emit_k)

    pad_spec = pl.BlockSpec((1, Hp, Wp, C), lambda n: (n, 0, 0, 0))
    full_spec = pl.BlockSpec((1, H, W, C), lambda n: (n, 0, 0, 0))
    vec_spec = pl.BlockSpec((1, 1, C), lambda n: (0, 0, 0))

    in_specs = [pad_spec, vec_spec,
                pl.BlockSpec((9 * C, C), lambda n: (0, 0)),
                vec_spec]
    in_specs += [pad_spec if kind == "pad" else full_spec
                 for _, kind in residuals if kind != "self"]

    combo_shape = jax.ShapeDtypeStruct((N, Hp, Wp, C), jnp.float32)
    if emit_k:
        out_shape = (jax.ShapeDtypeStruct((N, H, W, C), jnp.float32),
                     combo_shape)
        out_specs = (full_spec, pad_spec)
    else:
        out_shape = combo_shape
        out_specs = pad_spec

    return pl.pallas_call(
        kernel,
        out_shape=out_shape,
        grid=(N,),
        in_specs=in_specs,
        out_specs=out_specs,
        compiler_params=pltpu.CompilerParams(
            dimension_semantics=("parallel",),
            vmem_limit_bytes=64 * 1024 * 1024),
    )(x_pad, alpha3, w_packed, bias3, *res_arrays)


# ------------------------- model (params + forward) -------------------------

def init_residual_block(key, C):
    keys = jax.random.split(key, 6)
    bound = 1.0 / np.sqrt(C * 3 * 3)
    p = {}
    for i in range(3):
        w = jax.random.uniform(keys[2 * i], (C, C, 3, 3),
                               jnp.float32, -bound, bound)
        b = jax.random.uniform(keys[2 * i + 1], (C,),
                               jnp.float32, -bound, bound)
        p[f"w{i + 1}"] = w                          # f32 OIHW (reference)
        p[f"b{i + 1}"] = b
        p[f"a{i + 1}"] = jnp.full((C,), 0.25, jnp.float32)   # PReLU init
        p[f"w{i + 1}p"] = _pack_conv_weight(w)      # (9C, C) bf16 for kernels
    p["scales"] = (0.5, 2.0, -1.0, 4.0, 1.0 / 6.0)
    return p


def residual_block_fwd(x_pad, p, extra_add=None):
    s1, s2, s3, s4, s5 = p["scales"]
    # k1 = conv1(PReLU(x));   yn1 = s1*k1 + x
    k1, yn1 = fused_prelu_conv(x_pad, p["a1"], p["w1p"], p["b1"],
                               residuals=[(None, "self")],
                               coeffs=(s1, 1.0), emit_k=True)
    # k2 = conv2(PReLU(yn1)); yn2 = s2*k2 + x + s3*k1
    k2, yn2 = fused_prelu_conv(yn1, p["a2"], p["w2p"], p["b2"],
                               residuals=[(x_pad, "pad"), (k1, "full")],
                               coeffs=(s2, 1.0, s3), emit_k=True)
    # k3 = conv3(PReLU(yn2)); out = s5*k3 + s4*s5*k2 + s5*k1 + x (+ fused skip)
    res = [(k2, "full"), (k1, "full"), (x_pad, "pad")]
    cf = [s5, s4 * s5, s5, 1.0]
    if extra_add is not None:
        res.append((extra_add, "pad"))
        cf.append(1.0)
    out = fused_prelu_conv(yn2, p["a3"], p["w3p"], p["b3"],
                           residuals=res, coeffs=tuple(cf), emit_k=False)
    return out


def resnet_fwd(x_pad, params):
    out = residual_block_fwd(x_pad, params[0])
    out1 = residual_block_fwd(out, params[1], extra_add=x_pad)   # "+ x" fused
    out2 = residual_block_fwd(out1, params[2])
    out3 = residual_block_fwd(out2, params[3], extra_add=x_pad)  # "+ x" fused
    out4 = residual_block_fwd(out3, params[4])
    return out4                                                   # padded


class Feedbackblock:
    """Mirrors the PyTorch Feedbackblock stateful forward (state kept padded)."""
    # TODO(synk): .cuda()/copy_() in-place device-buffer semantics have no
    # Pallas equivalent; state is held as plain JAX arrays on the default device.

    def __init__(self, num_features, key):
        keys = jax.random.split(key, 5)
        self.params = [init_residual_block(k, num_features) for k in keys]
        self.should_reset = True
        self.last_hidden = None      # (N, H+2, W+2, C) zero-halo padded
        self.last_total = None
        self.number = -1

    def reset_state(self):
        self.should_reset = True

    def __call__(self, x_nchw):
        x = jnp.transpose(x_nchw, (0, 2, 3, 1)).astype(jnp.float32)   # NHWC
        x_pad = jnp.pad(x, ((0, 0), (1, 1), (1, 1), (0, 0)))          # one pad/call
        self.number += 1
        if self.should_reset:
            self.last_hidden = x_pad
            self.last_total = x_pad
            out_pad = resnet_fwd(x_pad, self.params)
            self.last_hidden = out_pad
            self.should_reset = False
        else:
            _ = self.last_total / self.number   # computed but unused (torch parity)
            self.last_total = self.last_total + self.last_hidden
            out_pad = resnet_fwd(self.last_hidden, self.params)
            self.last_hidden = out_pad
        out = out_pad[:, 1:-1, 1:-1, :]
        return jnp.transpose(out, (0, 3, 1, 2))                        # NCHW


# ------------------------ pure-JAX reference (check) ------------------------
# Matches the kernel numerics: bf16 conv operands, f32 accumulate, f32 epilogue.

def _ref_prelu_conv(x, alpha, w_oihw, b):
    xp = jnp.where(x > 0, x, x * alpha.reshape(1, 1, 1, -1))
    w_hwio = jnp.transpose(w_oihw, (2, 3, 1, 0)).astype(jnp.bfloat16)
    y = jax.lax.conv_general_dilated(
        xp.astype(jnp.bfloat16), w_hwio, (1, 1), "SAME",
        dimension_numbers=("NHWC", "HWIO", "NHWC"),
        preferred_element_type=jnp.float32)
    return y + b.reshape(1, 1, 1, -1)


def _ref_residual_block(x, p):
    s1, s2, s3, s4, s5 = p["scales"]
    k1 = _ref_prelu_conv(x, p["a1"], p["w1"], p["b1"])
    yn1 = k1 * s1 + x
    k2 = _ref_prelu_conv(yn1, p["a2"], p["w2"], p["b2"])
    yn2 = x + s2 * k2 + s3 * k1
    k3 = _ref_prelu_conv(yn2, p["a3"], p["w3"], p["b3"])
    return (k3 + k2 * s4 + k1) * s5 + x


def _ref_resnet(x, params):
    out = _ref_residual_block(x, params[0])
    out1 = _ref_residual_block(out, params[1]) + x
    out2 = _ref_residual_block(out1, params[2])
    out3 = _ref_residual_block(out2, params[3]) + x
    return _ref_residual_block(out3, params[4])


# ----------------------------------- main -----------------------------------

if __name__ == "__main__":
    key = jax.random.PRNGKey(0)
    kx, kp = jax.random.split(key)
    # small spatial extent, realistic (lane-dense) channel count
    N, C, H, W = 2, 128, 8, 8
    x = jax.random.normal(kx, (N, C, H, W), jnp.float32)   # NCHW like PyTorch

    model = Feedbackblock(C, kp)
    out = model(x)                                          # first call (reset path)
    out = jax.block_until_ready(out)
    assert out.shape == (N, C, H, W)

    # verify first-call semantics against a numerics-matched JAX reference
    x_nhwc = jnp.transpose(x, (0, 2, 3, 1))
    ref = jnp.transpose(_ref_resnet(x_nhwc, model.params), (0, 3, 1, 2))
    np.testing.assert_allclose(np.asarray(out), np.asarray(ref),
                               rtol=5e-3, atol=5e-3)

    # exercise the stateful (non-reset) path once as well
    out2 = jax.block_until_ready(model(x))
    assert out2.shape == (N, C, H, W)

    print("KERNEL_OK")
</pallas_src>

<mosaic_0001>
module attributes {stable_mosaic.version = 11 : i64} {
  func.func @_fused_prelu_conv_kernel(%arg0: i32, %arg1: memref<1x10x10x128xf32, #tpu.memory_space<vmem>>, %arg2: memref<1x1x128xf32, #tpu.memory_space<vmem>>, %arg3: memref<1152x128xbf16, #tpu.memory_space<vmem>>, %arg4: memref<1x1x128xf32, #tpu.memory_space<vmem>>, %arg5: memref<1x8x8x128xf32, #tpu.memory_space<vmem>>, %arg6: memref<1x10x10x128xf32, #tpu.memory_space<vmem>>) attributes {dimension_semantics = [#tpu.dimension_semantics<parallel>], iteration_bounds = array<i64: 2>, scalar_prefetch = 0 : i64, scratch_operands = 0 : i64, tpu.core_type = #tpu.core_type<tc>, window_params = [{transform_indices = @transform_0, window_bounds = array<i64: 1, 10, 10, 128>}, {pipeline_mode = #tpu.pipeline_mode<synchronous>, transform_indices = @transform_1, window_bounds = array<i64: 1, 1, 128>}, {pipeline_mode = #tpu.pipeline_mode<synchronous>, transform_indices = @transform_2, window_bounds = array<i64: 1152, 128>}, {pipeline_mode = #tpu.pipeline_mode<synchronous>, transform_indices = @transform_3, window_bounds = array<i64: 1, 1, 128>}, {transform_indices = @transform_4, window_bounds = array<i64: 1, 8, 8, 128>}, {transform_indices = @transform_5, window_bounds = array<i64: 1, 10, 10, 128>}]} {
    %c0 = arith.constant 0 : index
    %c0_0 = arith.constant 0 : index
    %c0_1 = arith.constant 0 : index
    %c0_2 = arith.constant 0 : index
    %0 = vector.load %arg1[%c0, %c0_0, %c0_1, %c0_2] : memref<1x10x10x128xf32, #tpu.memory_space<vmem>>, vector<1x10x10x128xf32>
    %1 = vector.shape_cast %0 : vector<1x10x10x128xf32> to vector<10x10x128xf32>
    %c0_3 = arith.constant 0 : index
    %c0_4 = arith.constant 0 : index
    %c0_5 = arith.constant 0 : index
    %2 = vector.load %arg2[%c0_3, %c0_4, %c0_5] : memref<1x1x128xf32, #tpu.memory_space<vmem>>, vector<1x1x128xf32>
    %cst = arith.constant 0.000000e+00 : f32
    %3 = vector.broadcast %cst : f32 to vector<10x10x128xf32>
    %4 = arith.cmpf ogt, %1, %3 : vector<10x10x128xf32>
    %5 = vector.broadcast %2 : vector<1x1x128xf32> to vector<10x10x128xf32>
    %6 = arith.mulf %1, %5 : vector<10x10x128xf32>
    %7 = arith.select %4, %1, %6 : vector<10x10x128xi1>, vector<10x10x128xf32>
    %8 = vector.extract_strided_slice %7 {offsets = [0, 0, 0], sizes = [8, 8, 128], strides = [1, 1, 1]} : vector<10x10x128xf32> to vector<8x8x128xf32>
    %9 = vector.shape_cast %8 : vector<8x8x128xf32> to vector<64x128xf32>
    %10 = arith.truncf %9 : vector<64x128xf32> to vector<64x128xbf16>
    %11 = vector.extract_strided_slice %7 {offsets = [0, 1, 0], sizes = [8, 8, 128], strides = [1, 1, 1]} : vector<10x10x128xf32> to vector<8x8x128xf32>
    %12 = vector.shape_cast %11 : vector<8x8x128xf32> to vector<64x128xf32>
    %13 = arith.truncf %12 : vector<64x128xf32> to vector<64x128xbf16>
    %14 = vector.extract_strided_slice %7 {offsets = [0, 2, 0], sizes = [8, 8, 128], strides = [1, 1, 1]} : vector<10x10x128xf32> to vector<8x8x128xf32>
    %15 = vector.shape_cast %14 : vector<8x8x128xf32> to vector<64x128xf32>
    %16 = arith.truncf %15 : vector<64x128xf32> to vector<64x128xbf16>
    %17 = vector.extract_strided_slice %7 {offsets = [1, 0, 0], sizes = [8, 8, 128], strides = [1, 1, 1]} : vector<10x10x128xf32> to vector<8x8x128xf32>
    %18 = vector.shape_cast %17 : vector<8x8x128xf32> to vector<64x128xf32>
    %19 = arith.truncf %18 : vector<64x128xf32> to vector<64x128xbf16>
    %20 = vector.extract_strided_slice %7 {offsets = [1, 1, 0], sizes = [8, 8, 128], strides = [1, 1, 1]} : vector<10x10x128xf32> to vector<8x8x128xf32>
    %21 = vector.shape_cast %20 : vector<8x8x128xf32> to vector<64x128xf32>
    %22 = arith.truncf %21 : vector<64x128xf32> to vector<64x128xbf16>
    %23 = vector.extract_strided_slice %7 {offsets = [1, 2, 0], sizes = [8, 8, 128], strides = [1, 1, 1]} : vector<10x10x128xf32> to vector<8x8x128xf32>
    %24 = vector.shape_cast %23 : vector<8x8x128xf32> to vector<64x128xf32>
    %25 = arith.truncf %24 : vector<64x128xf32> to vector<64x128xbf16>
    %26 = vector.extract_strided_slice %7 {offsets = [2, 0, 0], sizes = [8, 8, 128], strides = [1, 1, 1]} : vector<10x10x128xf32> to vector<8x8x128xf32>
    %27 = vector.shape_cast %26 : vector<8x8x128xf32> to vector<64x128xf32>
    %28 = arith.truncf %27 : vector<64x128xf32> to vector<64x128xbf16>
    %29 = vector.extract_strided_slice %7 {offsets = [2, 1, 0], sizes = [8, 8, 128], strides = [1, 1, 1]} : vector<10x10x128xf32> to vector<8x8x128xf32>
    %30 = vector.shape_cast %29 : vector<8x8x128xf32> to vector<64x128xf32>
    %31 = arith.truncf %30 : vector<64x128xf32> to vector<64x128xbf16>
    %32 = vector.extract_strided_slice %7 {offsets = [2, 2, 0], sizes = [8, 8, 128], strides = [1, 1, 1]} : vector<10x10x128xf32> to vector<8x8x128xf32>
    %33 = vector.shape_cast %32 : vector<8x8x128xf32> to vector<64x128xf32>
    %34 = arith.truncf %33 : vector<64x128xf32> to vector<64x128xbf16>
    %35 = tpu.concatenate %10, %13, %16, %19, %22, %25, %28, %31, %34 in 1 : vector<64x128xbf16>, vector<64x128xbf16>, vector<64x128xbf16>, vector<64x128xbf16>, vector<64x128xbf16>, vector<64x128xbf16>, vector<64x128xbf16>, vector<64x128xbf16>, vector<64x128xbf16> -> vector<64x1152xbf16>
    %c0_6 = arith.constant 0 : index
    %c0_7 = arith.constant 0 : index
    %36 = vector.load %arg3[%c0_6, %c0_7] : memref<1152x128xbf16, #tpu.memory_space<vmem>>, vector<1152x128xbf16>
    %cst_8 = arith.constant dense<0.000000e+00> : vector<64x128xf32>
    %37 = tpu.matmul %35, %36, %cst_8 {dimension_numbers = #tpu.dot_dimension_numbers<[1], [0], [0], [1], [0, 0, 1, 1], [], []>} : vector<64x1152xbf16>, vector<1152x128xbf16>, vector<64x128xf32> -> vector<64x128xf32>
    %38 = vector.shape_cast %37 : vector<64x128xf32> to vector<8x8x128xf32>
    %c0_9 = arith.constant 0 : index
    %c0_10 = arith.constant 0 : index
    %c0_11 = arith.constant 0 : index
    %39 = vector.load %arg4[%c0_9, %c0_10, %c0_11] : memref<1x1x128xf32, #tpu.memory_space<vmem>>, vector<1x1x128xf32>
    %40 = vector.broadcast %39 : vector<1x1x128xf32> to vector<8x8x128xf32>
    %41 = arith.addf %38, %40 : vector<8x8x128xf32>
    %cst_12 = arith.constant 5.000000e-01 : f32
    %42 = vector.broadcast %cst_12 : f32 to vector<8x8x128xf32>
    %43 = arith.mulf %41, %42 : vector<8x8x128xf32>
    %44 = vector.extract_strided_slice %1 {offsets = [1, 1, 0], sizes = [8, 8, 128], strides = [1, 1, 1]} : vector<10x10x128xf32> to vector<8x8x128xf32>
    %45 = arith.addf %43, %44 : vector<8x8x128xf32>
    %c0_13 = arith.constant 0 : index
    %c0_14 = arith.constant 0 : index
    %c0_15 = arith.constant 0 : index
    %c0_16 = arith.constant 0 : index
    %46 = vector.load %arg5[%c0_13, %c0_14, %c0_15, %c0_16] : memref<1x8x8x128xf32, #tpu.memory_space<vmem>>, vector<1x8x8x128xf32>
    %47 = vector.shape_cast %46 : vector<1x8x8x128xf32> to vector<8x8x128xf32>
    %48 = vector.shape_cast %41 : vector<8x8x128xf32> to vector<1x8x8x128xf32>
    tpu.vector_store %arg5[%c0_13, %c0_14, %c0_15, %c0_16], %48 {strides = array<i32>} : memref<1x8x8x128xf32, #tpu.memory_space<vmem>>, vector<1x8x8x128xf32>,
    %cst_17 = arith.constant 0.000000e+00 : f32
    %49 = vector.broadcast %cst_17 : f32 to vector<1x10x10x128xf32>
    %c0_18 = arith.constant 0 : index
    %c0_19 = arith.constant 0 : index
    %c0_20 = arith.constant 0 : index
    %c0_21 = arith.constant 0 : index
    %50 = vector.load %arg6[%c0_18, %c0_19, %c0_20, %c0_21] : memref<1x10x10x128xf32, #tpu.memory_space<vmem>>, vector<1x10x10x128xf32>
    tpu.vector_store %arg6[%c0_18, %c0_19, %c0_20, %c0_21], %49 {strides = array<i32>} : memref<1x10x10x128xf32, #tpu.memory_space<vmem>>, vector<1x10x10x128xf32>,
    %c0_22 = arith.constant 0 : index
    %c1 = arith.constant 1 : index
    %c1_23 = arith.constant 1 : index
    %c0_24 = arith.constant 0 : index
    %51 = vector.load %arg6[%c0_22, %c1, %c1_23, %c0_24] : memref<1x10x10x128xf32, #tpu.memory_space<vmem>>, vector<1x8x8x128xf32>
    %52 = vector.shape_cast %51 : vector<1x8x8x128xf32> to vector<8x8x128xf32>
    %53 = vector.shape_cast %45 : vector<8x8x128xf32> to vector<1x8x8x128xf32>
    tpu.vector_store %arg6[%c0_22, %c1, %c1_23, %c0_24], %53 {strides = array<i32>} : memref<1x10x10x128xf32, #tpu.memory_space<vmem>>, vector<1x8x8x128xf32>,
    return
  }
  func.func @transform_0(%arg0: i32) -> (i32, i32, i32, i32) {
    %c0_i32 = arith.constant 0 : i32
    %c0_i32_0 = arith.constant 0 : i32
    %c0_i32_1 = arith.constant 0 : i32
    %c0_i32_2 = arith.constant 0 : i32
    return %arg0, %c0_i32, %c0_i32_0, %c0_i32_1 : i32, i32, i32, i32
  }
  func.func @transform_1(%arg0: i32) -> (i32, i32, i32) {
    %c0_i32 = arith.constant 0 : i32
    %c0_i32_0 = arith.constant 0 : i32
    %c0_i32_1 = arith.constant 0 : i32
    %c0_i32_2 = arith.constant 0 : i32
    return %c0_i32, %c0_i32_0, %c0_i32_1 : i32, i32, i32
  }
  func.func @transform_2(%arg0: i32) -> (i32, i32) {
    %c0_i32 = arith.constant 0 : i32
    %c0_i32_0 = arith.constant 0 : i32
    %c0_i32_1 = arith.constant 0 : i32
    return %c0_i32, %c0_i32_0 : i32, i32
  }
  func.func @transform_3(%arg0: i32) -> (i32, i32, i32) {
    %c0_i32 = arith.constant 0 : i32
    %c0_i32_0 = arith.constant 0 : i32
    %c0_i32_1 = arith.constant 0 : i32
    %c0_i32_2 = arith.constant 0 : i32
    return %c0_i32, %c0_i32_0, %c0_i32_1 : i32, i32, i32
  }
  func.func @transform_4(%arg0: i32) -> (i32, i32, i32, i32) {
    %c0_i32 = arith.constant 0 : i32
    %c0_i32_0 = arith.constant 0 : i32
    %c0_i32_1 = arith.constant 0 : i32
    %c0_i32_2 = arith.constant 0 : i32
    return %arg0, %c0_i32, %c0_i32_0, %c0_i32_1 : i32, i32, i32, i32
  }
  func.func @transform_5(%arg0: i32) -> (i32, i32, i32, i32) {
    %c0_i32 = arith.constant 0 : i32
    %c0_i32_0 = arith.constant 0 : i32
    %c0_i32_1 = arith.constant 0 : i32
    %c0_i32_2 = arith.constant 0 : i32
    return %arg0, %c0_i32, %c0_i32_0, %c0_i32_1 : i32, i32, i32, i32
  }
}

</mosaic_0001>

<llo_original>
// kernel: tpu_custom_call.1
$region0: #{tpu_custom_call.1}
  #allocation0 [shape = 'u32[]', space=smem, size = 0x4, offset = 0x4, fixed_abs, tag = 'smem constant byte address 0x4 - core index']
  #allocation1 [shape = 'u32[144,128]{1,0:T(1,128)}', space=vmem, size = 0x12000, scoped, tag = 'internal scratch']
  %s0 = inlined_call_operand.vmem [shape: f32[2,10,10,128], index: 0, kind: input, shape index: {}]
  %s1 = inlined_call_operand.vmem [shape: f32[1,1,128], index: 1, kind: input, shape index: {}]
  %s2 = inlined_call_operand.hbm [shape: bf16[1152,128], index: 2, kind: input, shape index: {}]
  %s3 = inlined_call_operand.vmem [shape: f32[1,1,128], index: 3, kind: input, shape index: {}]
  %s4 = inlined_call_operand.hbm [shape: f32[2,8,8,128], index: 4, kind: output, shape index: {0}]
  %s5 = inlined_call_operand.vmem [shape: f32[2,10,10,128], index: 5, kind: output, shape index: {1}]
  %6 = xla_tuple %s4, %s5
  %s7 = sld [smem:[#allocation0]]
  $region61: #{tpu_custom_call.1} parent=0
    _
  %s9 = ssub.s32 1, %s7
  %s10 = scalar_select 0, %s9, %s7
  $region1: #{tpu_custom_call.1} parent=0
    #allocation2 [shape = 'u8[294912]{0}', space=vmem, size = 0x48000, scoped, tag = 'input window, operand 2, single buffered']
    #allocation3 [shape = 's32[2]{0}', space=sflag, size = 0x8, scoped, tag = 'scoped memory for tpu_custom_call.1']
    #allocation4 [shape = 's32[2]{0}', space=sflag, size = 0x8, scoped, tag = 'scoped memory for tpu_custom_call.1']
    #allocation5 [shape = 'u8[65536]{0}', space=vmem, size = 0x10000, scoped, tag = 'output window, operand 0']
    %11 = vsyncpa [#allocation3], 0
    %12 = vsyncpa [#allocation4], 0
    %s13 = scalar_lea.sflag [#allocation4], 1
    %14 = vsyncpa %s13, 0
    loop: start=0, step=1, limit=4
    $region2: #{tpu_custom_call.1} parent=1 // loop_pre_header
      _
    $region3: #{tpu_custom_call.1} parent=1 // loop_header
      %s16 = sphi 0, %s20
      %p17 = scmp.ge.s32.totalorder %s16, 4
      %s26 = sphi 0, %s28
      %s29 = sphi 0, %s26
      %s30 = sphi 0, %s29
      %s46 = sphi 0, %s30
      %s50 = sphi 0, %s50
      %s52 = sphi 0, %s50
      %s53 = sphi 0, %s52
      %s67 = sphi 0, %s53
      %s71 = sphi 0, %s71
      %s73 = sphi 0, %s71
      %s74 = sphi 0, %s73
      %s88 = sphi 0, %s74
      %s92 = sphi 0, %s92
      %s94 = sphi 0, %s92
      %s95 = sphi 0, %s94
      %s109 = sphi 0, %s95
      %s115 = sphi 0, %s117
      %s118 = sphi 0, %s115
      %s119 = sphi 0, %s118
      %s135 = sphi 0, %s119
      %s141 = sphi 0, %s143
      %s144 = sphi 0, %s141
      %s145 = sphi 0, %s144
      %s161 = sphi 0, %s145
    $region4: #{tpu_custom_call.1} parent=1 // loop_header_branch
      %19 = sbr.rel (%p17) target = $region8
    $region5: #{tpu_custom_call.1} parent=1 // loop_body
      %s21 = ssub.s32 %s16, 1
      %s22 = ssub.s32 %s16, 2
      %s23 = sadd.s32 %s16, 1
      %s24 = ssub.s32 %s16, %s23
      %p25 = scmp.eq.s32.totalorder %s24, 0
      %s27 = sadd.s32 %s26, 1
      %s28 = scalar_select %p25, %s26, %s27
      %p31 = pneg %p25
      %p32 = scmp.eq.s32.totalorder %s16, 1
      %p33 = por %p31, %p32
      %p34 = scmp.ne.s32.totalorder %s26, %s29
      %p35 = scmp.eq.s32.totalorder %s16, 0
      %p36 = por %p34, %p35
      %p37 = scmp.ne.s32.totalorder %s26, %s29
      %p38 = scmp.eq.s32.totalorder %s21, 1
      %p39 = por %p37, %p38
      %p40 = scmp.ne.s32.totalorder %s29, %s30
      %p41 = scmp.eq.s32.totalorder %s21, 0
      %p42 = por %p40, %p41
      %p43 = scmp.ne.s32.totalorder %s29, %s30
      %p44 = scmp.eq.s32.totalorder %s22, 1
      %p45 = por %p43, %p44
      %p47 = scmp.ne.s32.totalorder %s30, %s46
      %p48 = scmp.eq.s32.totalorder %s22, 0
      %p49 = por %p47, %p48
      %s51 = sadd.s32 %s50, 1
      %p54 = scmp.eq.s32.totalorder %s16, 1
      %p55 = scmp.ne.s32.totalorder %s50, %s52
      %p56 = scmp.eq.s32.totalorder %s16, 0
      %p57 = por %p55, %p56
      %p58 = scmp.ne.s32.totalorder %s50, %s52
      %p59 = scmp.eq.s32.totalorder %s21, 1
      %p60 = por %p58, %p59
      %p61 = scmp.ne.s32.totalorder %s52, %s53
      %p62 = scmp.eq.s32.totalorder %s21, 0
      %p63 = por %p61, %p62
      %p64 = scmp.ne.s32.totalorder %s52, %s53
      %p65 = scmp.eq.s32.totalorder %s22, 1
      %p66 = por %p64, %p65
      %p68 = scmp.ne.s32.totalorder %s53, %s67
      %p69 = scmp.eq.s32.totalorder %s22, 0
      %p70 = por %p68, %p69
      %s72 = sadd.s32 %s71, 1
      %p75 = scmp.eq.s32.totalorder %s16, 1
      %p76 = scmp.ne.s32.totalorder %s71, %s73
      %p77 = scmp.eq.s32.totalorder %s16, 0
      %p78 = por %p76, %p77
      %p79 = scmp.ne.s32.totalorder %s71, %s73
      %p80 = scmp.eq.s32.totalorder %s21, 1
      %p81 = por %p79, %p80
      %p82 = scmp.ne.s32.totalorder %s73, %s74
      %p83 = scmp.eq.s32.totalorder %s21, 0
      %p84 = por %p82, %p83
      %p85 = scmp.ne.s32.totalorder %s73, %s74
      %p86 = scmp.eq.s32.totalorder %s22, 1
      %p87 = por %p85, %p86
      %p89 = scmp.ne.s32.totalorder %s74, %s88
      %p90 = scmp.eq.s32.totalorder %s22, 0
      %p91 = por %p89, %p90
      %s93 = sadd.s32 %s92, 1
      %p96 = scmp.eq.s32.totalorder %s16, 1
      %p97 = scmp.ne.s32.totalorder %s92, %s94
      %p98 = scmp.eq.s32.totalorder %s16, 0
      %p99 = por %p97, %p98
      %p100 = scmp.ne.s32.totalorder %s92, %s94
      %p101 = scmp.eq.s32.totalorder %s21, 1
      %p102 = por %p100, %p101
      %p103 = scmp.ne.s32.totalorder %s94, %s95
      %p104 = scmp.eq.s32.totalorder %s21, 0
      %p105 = por %p103, %p104
      %p106 = scmp.ne.s32.totalorder %s94, %s95
      %p107 = scmp.eq.s32.totalorder %s22, 1
      %p108 = por %p106, %p107
      %p110 = scmp.ne.s32.totalorder %s95, %s109
      %p111 = scmp.eq.s32.totalorder %s22, 0
      %p112 = por %p110, %p111
      %s113 = ssub.s32 %s16, %s23
      %p114 = scmp.eq.s32.totalorder %s113, 0
      %s116 = sadd.s32 %s115, 1
      %s117 = scalar_select %p114, %s115, %s116
      %p120 = pneg %p114
      %p121 = scmp.eq.s32.totalorder %s16, 1
      %p122 = por %p120, %p121
      %p123 = scmp.ne.s32.totalorder %s115, %s118
      %p124 = scmp.eq.s32.totalorder %s16, 0
      %p125 = por %p123, %p124
      %p126 = scmp.ne.s32.totalorder %s115, %s118
      %p127 = scmp.eq.s32.totalorder %s21, 1
      %p128 = por %p126, %p127
      %p129 = scmp.ne.s32.totalorder %s118, %s119
      %p130 = scmp.eq.s32.totalorder %s21, 0
      %p131 = por %p129, %p130
      %p132 = scmp.ne.s32.totalorder %s118, %s119
      %p133 = scmp.eq.s32.totalorder %s22, 1
      %p134 = por %p132, %p133
      %p136 = scmp.ne.s32.totalorder %s119, %s135
      %p137 = scmp.eq.s32.totalorder %s22, 0
      %p138 = por %p136, %p137
      %s139 = ssub.s32 %s16, %s23
      %p140 = scmp.eq.s32.totalorder %s139, 0
      %s142 = sadd.s32 %s141, 1
      %s143 = scalar_select %p140, %s141, %s142
      %p146 = pneg %p140
      %p147 = scmp.eq.s32.totalorder %s16, 1
      %p148 = por %p146, %p147
      %p149 = scmp.ne.s32.totalorder %s141, %s144
      %p150 = scmp.eq.s32.totalorder %s16, 0
      %p151 = por %p149, %p150
      %p152 = scmp.ne.s32.totalorder %s141, %s144
      %p153 = scmp.eq.s32.totalorder %s21, 1
      %p154 = por %p152, %p153
      %p155 = scmp.ne.s32.totalorder %s144, %s145
      %p156 = scmp.eq.s32.totalorder %s21, 0
      %p157 = por %p155, %p156
      %p158 = scmp.ne.s32.totalorder %s144, %s145
      %p159 = scmp.eq.s32.totalorder %s22, 1
      %p160 = por %p158, %p159
      %p162 = scmp.ne.s32.totalorder %s145, %s161
      %p163 = scmp.eq.s32.totalorder %s22, 0
      %p164 = por %p162, %p163
      %p165 = scmp.le.s32.totalorder 1, %s16
      %p166 = scmp.lt.s32.totalorder %s16, 3
      %p167 = pnand %p165, %p166
      %p168 = pneg %p167
      // Predicated region
      $region9: #{tpu_custom_call.1} parent=5 // pred_check
        _
      $region10: #{tpu_custom_call.1} parent=5 // pred_check_branch
        %170 = sbr.rel (%p167) target = $region12
      $region11: #{tpu_custom_call.1} parent=5 // pred_region
        %s171 = ssub.s32 %s16, 1
        // Predicated region
        $region13: #{tpu_custom_call.1} parent=11 // pred_check
          %p172 = pneg %p63
        $region14: #{tpu_custom_call.1} parent=11 // pred_check_branch
          %174 = sbr.rel (%p172) target = $region16
        $region15: #{tpu_custom_call.1} parent=11 // pred_region
          _
        $region16: #{tpu_custom_call.1} parent=11 // pred_fallthru
          _
        // Predicated region
        $region17: #{tpu_custom_call.1} parent=11 // pred_check
          %p175 = pneg %p84
        $region18: #{tpu_custom_call.1} parent=11 // pred_check_branch
          %177 = sbr.rel (%p175) target = $region20
        $region19: #{tpu_custom_call.1} parent=11 // pred_region
          %s179 = ssub.s32 9216, 9216
          %180 = vsyncadd [#allocation3], %s179
          %s181 = sshll.u32 [#allocation2], 4
          %s182 = int_to_ptr.vmem [resolvable:$true] %s181
          %187 = dma.hbm_to_vmem [thread:$0]  %s2, 9216, %s182, [#allocation3], 64, 64, 4
        $region20: #{tpu_custom_call.1} parent=11 // pred_fallthru
          _
        // Predicated region
        $region21: #{tpu_custom_call.1} parent=11 // pred_check
          %p188 = pneg %p105
        $region22: #{tpu_custom_call.1} parent=11 // pred_check_branch
          %190 = sbr.rel (%p188) target = $region24
        $region23: #{tpu_custom_call.1} parent=11 // pred_region
          _
        $region24: #{tpu_custom_call.1} parent=11 // pred_fallthru
          _
      $region12: #{tpu_custom_call.1} parent=5 // pred_fallthru
        _
      %p191 = scmp.lt.s32.totalorder %s16, 2
      // Predicated region
      $region25: #{tpu_custom_call.1} parent=5 // pred_check
        %p192 = pneg %p191
      $region26: #{tpu_custom_call.1} parent=5 // pred_check_branch
        %194 = sbr.rel (%p192) target = $region28
      $region27: #{tpu_custom_call.1} parent=5 // pred_region
        // Predicated region
        $region29: #{tpu_custom_call.1} parent=27 // pred_check
          %p195 = pneg %p36
        $region30: #{tpu_custom_call.1} parent=27 // pred_check_branch
          %197 = sbr.rel (%p195) target = $region32
        $region31: #{tpu_custom_call.1} parent=27 // pred_region
          %p198 = scmp.lt.s32.totalorder %s16, 1
          %s199 = scalar_select %p198, %s16, 1
          %s200 = smul.addr %s199, 20
          %s201 = smul.addr %s200, 8
          %s202 = scalar_lea.vmem %s0, %s201
        $region32: #{tpu_custom_call.1} parent=27 // pred_fallthru
          _
      $region28: #{tpu_custom_call.1} parent=5 // pred_fallthru
        _
      %p203 = scmp.le.s32.totalorder 1, %s16
      %p204 = scmp.lt.s32.totalorder %s16, 3
      %p205 = pnand %p203, %p204
      %p206 = pneg %p205
      // Predicated region
      $region33: #{tpu_custom_call.1} parent=5 // pred_check
        _
      $region34: #{tpu_custom_call.1} parent=5 // pred_check_branch
        %208 = sbr.rel (%p205) target = $region36
      $region35: #{tpu_custom_call.1} parent=5 // pred_region
        %s209 = ssub.s32 %s16, 1
        // Predicated region
        $region37: #{tpu_custom_call.1} parent=35 // pred_check
          %p210 = pneg %p84
        $region38: #{tpu_custom_call.1} parent=35 // pred_check_branch
          %212 = sbr.rel (%p210) target = $region40
        $region39: #{tpu_custom_call.1} parent=35 // pred_region
          %213 = dma.done [#allocation3], 9216
        $region40: #{tpu_custom_call.1} parent=35 // pred_fallthru
          _
        %p214 = scmp.lt.s32.totalorder %s21, 1
        %s215 = scalar_select %p214, %s21, 1
        %s216 = smul.addr %s215, 20
        %s217 = smul.addr %s216, 8
        %s218 = scalar_lea.vmem %s0, %s217
        %p219 = pneg %p42
        %p220 = pneg %p39
        %p221 = pneg %p63
        %p222 = pneg %p60
        %p223 = pneg %p84
        %p224 = pneg %p81
        %p225 = pneg %p105
        %p226 = pneg %p102
        %p227 = pneg %p131
        %p228 = pneg %p128
        %s229 = sand.u32 %s118, 1
        %s230 = scalar_lea.sflag [#allocation4], %s229
        %s231 = sand.u32 %s118, 1
        %s232 = smul.addr %s231, 64
        %s233 = scalar_lea.vmem [#allocation5], %s232
        %p234 = pneg %p157
        %p235 = pneg %p154
        %p236 = scmp.lt.s32.totalorder %s21, 1
        %s237 = scalar_select %p236, %s21, 1
        %s238 = smul.addr %s237, 20
        %s239 = smul.addr %s238, 8
        %s240 = scalar_lea.vmem %s5, %s239
        %p241 = scmp.lt.s32.totalorder %s21, 1
        %s242 = scalar_select %p241, %s21, 1
        %s243 = smul.addr %s242, 20
        %s244 = smul.addr %s243, 8
        %s245 = scalar_lea.vmem %s0, %s244
        %p246 = scmp.lt.s32.totalorder %s21, 1
        %s247 = scalar_select %p246, %s21, 1
        %s248 = smul.addr %s247, 20
        %s249 = smul.addr %s248, 8
        %s250 = scalar_lea.vmem %s5, %s249
        %v252 = vld [vmem:[%s245] sm:$0xff]
        %v253 = vld [vmem:[%s245 + $0x8] sm:$0x3]
        %v254 = vld [vmem:[%s245 + $0x10] sm:$0xff]
        %v255 = vld [vmem:[%s245 + $0x18] sm:$0x3]
        %v256 = vld [vmem:[%s245 + $0x20] sm:$0xff]
        %v257 = vld [vmem:[%s245 + $0x28] sm:$0x3]
        %v258 = vld [vmem:[%s245 + $0x30] sm:$0xff]
        %v259 = vld [vmem:[%s245 + $0x38] sm:$0x3]
        %v260 = vld [vmem:[%s245 + $0x40] sm:$0xff]
        %v261 = vld [vmem:[%s245 + $0x48] sm:$0x3]
        %v262 = vld [vmem:[%s245 + $0x50] sm:$0xff]
        %v263 = vld [vmem:[%s245 + $0x58] sm:$0x3]
        %v264 = vld [vmem:[%s245 + $0x60] sm:$0xff]
        %v265 = vld [vmem:[%s245 + $0x68] sm:$0x3]
        %v266 = vld [vmem:[%s245 + $0x70] sm:$0xff]
        %v267 = vld [vmem:[%s245 + $0x78] sm:$0x3]
        %v268 = vld [vmem:[%s245 + $0x80] sm:$0xff]
        %v269 = vld [vmem:[%s245 + $0x88] sm:$0x3]
        %v270 = vld [vmem:[%s245 + $0x90] sm:$0xff]
        %v271 = vld [vmem:[%s245 + $0x98] sm:$0x3]
        %v272 = vld [vmem:[%s1] sm:$0x1]
        %vm273 = vcmp.gt.f32.partialorder %v252, 0.0
        %vm274 = vcmp.gt.f32.partialorder %v253, 0.0
        %vm275 = vcmp.gt.f32.partialorder %v254, 0.0
        %vm276 = vcmp.gt.f32.partialorder %v255, 0.0
        %vm277 = vcmp.gt.f32.partialorder %v256, 0.0
        %vm278 = vcmp.gt.f32.partialorder %v257, 0.0
        %vm279 = vcmp.gt.f32.partialorder %v258, 0.0
        %vm280 = vcmp.gt.f32.partialorder %v259, 0.0
        %vm281 = vcmp.gt.f32.partialorder %v260, 0.0
        %vm282 = vcmp.gt.f32.partialorder %v261, 0.0
        %vm283 = vcmp.gt.f32.partialorder %v262, 0.0
        %vm284 = vcmp.gt.f32.partialorder %v263, 0.0
        %vm285 = vcmp.gt.f32.partialorder %v264, 0.0
        %vm286 = vcmp.gt.f32.partialorder %v265, 0.0
        %vm287 = vcmp.gt.f32.partialorder %v266, 0.0
        %vm288 = vcmp.gt.f32.partialorder %v267, 0.0
        %vm289 = vcmp.gt.f32.partialorder %v268, 0.0
        %vm290 = vcmp.gt.f32.partialorder %v269, 0.0
        %vm291 = vcmp.gt.f32.partialorder %v270, 0.0
        %vm292 = vcmp.gt.f32.partialorder %v271, 0.0
        %v294 = vlaneseq
        %v295 = vshrl.u32 %v294, 7
        %v296 = vsub.s32 0, %v295
        %v297 = vrot.slane %v272, %v296
        %v299 = vmul.f32 %v252, %v297
        %v300 = vmul.f32 %v253, %v297
        %v301 = vmul.f32 %v254, %v297
        %v302 = vmul.f32 %v255, %v297
        %v303 = vmul.f32 %v256, %v297
        %v304 = vmul.f32 %v257, %v297
        %v305 = vmul.f32 %v258, %v297
        %v306 = vmul.f32 %v259, %v297
        %v307 = vmul.f32 %v260, %v297
        %v308 = vmul.f32 %v261, %v297
        %v309 = vmul.f32 %v262, %v297
        %v310 = vmul.f32 %v263, %v297
        %v311 = vmul.f32 %v264, %v297
        %v312 = vmul.f32 %v265, %v297
        %v313 = vmul.f32 %v266, %v297
        %v314 = vmul.f32 %v267, %v297
        %v315 = vmul.f32 %v268, %v297
        %v316 = vmul.f32 %v269, %v297
        %v317 = vmul.f32 %v270, %v297
        %v318 = vmul.f32 %v271, %v297
        %v319 = vsel %vm273, %v252, %v299
        %v320 = vsel %vm274, %v253, %v300
        %v321 = vsel %vm275, %v254, %v301
        %v322 = vsel %vm276, %v255, %v302
        %v323 = vsel %vm277, %v256, %v303
        %v324 = vsel %vm278, %v257, %v304
        %v325 = vsel %vm279, %v258, %v305
        %v326 = vsel %vm280, %v259, %v306
        %v327 = vsel %vm281, %v260, %v307
        %v328 = vsel %vm282, %v261, %v308
        %v329 = vsel %vm283, %v262, %v309
        %v330 = vsel %vm284, %v263, %v310
        %v331 = vsel %vm285, %v264, %v311
        %v332 = vsel %vm286, %v265, %v312
        %v333 = vsel %vm287, %v266, %v313
        %v334 = vsel %vm288, %v267, %v314
        %v335 = vsel %vm289, %v268, %v315
        %v336 = vsel %vm290, %v269, %v316
        %v337 = vsel %vm291, %v270, %v317
        %v338 = vsel %vm292, %v271, %v318
        %v339 = vpack.c.bf16 %v321, %v319
        %v340 = vpack.c.bf16 %v325, %v323
        %v341 = vpack.c.bf16 %v329, %v327
        %v342 = vpack.c.bf16 %v333, %v331
        %vm359 = vcmask 1046528
        %v360 = vrot.slane %v319, 1
        %v361 = vrot.slane %v320, 1
        %v362 = vsel %vm359, %v360, %v361
        %v363 = vrot.slane %v321, 1
        %v364 = vrot.slane %v322, 1
        %v365 = vsel %vm359, %v363, %v364
        %v366 = vrot.slane %v323, 1
        %v367 = vrot.slane %v324, 1
        %v368 = vsel %vm359, %v366, %v367
        %v369 = vrot.slane %v325, 1
        %v370 = vrot.slane %v326, 1
        %v371 = vsel %vm359, %v369, %v370
        %v372 = vrot.slane %v327, 1
        %v373 = vrot.slane %v328, 1
        %v374 = vsel %vm359, %v372, %v373
        %v375 = vrot.slane %v329, 1
        %v376 = vrot.slane %v330, 1
        %v377 = vsel %vm359, %v375, %v376
        %v378 = vrot.slane %v331, 1
        %v379 = vrot.slane %v332, 1
        %v380 = vsel %vm359, %v378, %v379
        %v381 = vrot.slane %v333, 1
        %v382 = vrot.slane %v334, 1
        %v383 = vsel %vm359, %v381, %v382
        %v392 = vpack.c.bf16 %v365, %v362
        %v393 = vpack.c.bf16 %v371, %v368
        %v394 = vpack.c.bf16 %v377, %v374
        %v395 = vpack.c.bf16 %v383, %v380
        %vm396 = vcmask 1045504
        %v397 = vrot.slane %v319, 2
        %v398 = vrot.slane %v320, 2
        %v399 = vsel %vm396, %v397, %v398
        %v400 = vrot.slane %v321, 2
        %v401 = vrot.slane %v322, 2
        %v402 = vsel %vm396, %v400, %v401
        %v403 = vrot.slane %v323, 2
        %v404 = vrot.slane %v324, 2
        %v405 = vsel %vm396, %v403, %v404
        %v406 = vrot.slane %v325, 2
        %v407 = vrot.slane %v326, 2
        %v408 = vsel %vm396, %v406, %v407
        %v409 = vrot.slane %v327, 2
        %v410 = vrot.slane %v328, 2
        %v411 = vsel %vm396, %v409, %v410
        %v412 = vrot.slane %v329, 2
        %v413 = vrot.slane %v330, 2
        %v414 = vsel %vm396, %v412, %v413
        %v415 = vrot.slane %v331, 2
        %v416 = vrot.slane %v332, 2
        %v417 = vsel %vm396, %v415, %v416
        %v418 = vrot.slane %v333, 2
        %v419 = vrot.slane %v334, 2
        %v420 = vsel %vm396, %v418, %v419
        %v429 = vpack.c.bf16 %v402, %v399
        %v430 = vpack.c.bf16 %v408, %v405
        %v431 = vpack.c.bf16 %v414, %v411
        %v432 = vpack.c.bf16 %v420, %v417
        %v433 = vpack.c.bf16 %v323, %v321
        %v434 = vpack.c.bf16 %v327, %v325
        %v435 = vpack.c.bf16 %v331, %v329
        %v436 = vpack.c.bf16 %v335, %v333
        %v439 = vrot.slane %v335, 1
        %v440 = vrot.slane %v336, 1
        %v441 = vsel %vm359, %v439, %v440
        %v443 = vpack.c.bf16 %v368, %v365
        %v444 = vpack.c.bf16 %v374, %v371
        %v445 = vpack.c.bf16 %v380, %v377
        %v446 = vpack.c.bf16 %v441, %v383
        %v447 = vrot.slane %v335, 2
        %v448 = vrot.slane %v336, 2
        %v449 = vsel %vm396, %v447, %v448
        %v451 = vpack.c.bf16 %v405, %v402
        %v452 = vpack.c.bf16 %v411, %v408
        %v453 = vpack.c.bf16 %v417, %v414
        %v454 = vpack.c.bf16 %v449, %v420
        %v455 = vpack.c.bf16 %v337, %v335
        %v458 = vrot.slane %v337, 1
        %v459 = vrot.slane %v338, 1
        %v460 = vsel %vm359, %v458, %v459
        %v462 = vpack.c.bf16 %v460, %v441
        %v463 = vrot.slane %v337, 2
        %v464 = vrot.slane %v338, 2
        %v465 = vsel %vm396, %v463, %v464
        %v467 = vpack.c.bf16 %v465, %v449
        %v468 = vld [vmem:[#allocation2] sm:$0xf]
        %v469 = vld [vmem:[#allocation2 + $0x4] sm:$0xf]
        %v470 = vld [vmem:[#allocation2 + $0x8] sm:$0xf]
        %v471 = vld [vmem:[#allocation2 + $0xc] sm:$0xf]
        %v472 = vld [vmem:[#allocation2 + $0x10] sm:$0xf]
        %v473 = vld [vmem:[#allocation2 + $0x14] sm:$0xf]
        %v474 = vld [vmem:[#allocation2 + $0x18] sm:$0xf]
        %v475 = vld [vmem:[#allocation2 + $0x1c] sm:$0xf]
        %v476 = vld [vmem:[#allocation2 + $0x20] sm:$0xf]
        %v477 = vld [vmem:[#allocation2 + $0x24] sm:$0xf]
        %v478 = vld [vmem:[#allocation2 + $0x28] sm:$0xf]
        %v479 = vld [vmem:[#allocation2 + $0x2c] sm:$0xf]
        %v480 = vld [vmem:[#allocation2 + $0x30] sm:$0xf]
        %v481 = vld [vmem:[#allocation2 + $0x34] sm:$0xf]
        %v482 = vld [vmem:[#allocation2 + $0x38] sm:$0xf]
        %v483 = vld [vmem:[#allocation2 + $0x3c] sm:$0xf]
        %v484 = vld [vmem:[#allocation2 + $0x40] sm:$0xf]
        %v485 = vld [vmem:[#allocation2 + $0x44] sm:$0xf]
        %v486 = vld [vmem:[#allocation2 + $0x48] sm:$0xf]
        %v487 = vld [vmem:[#allocation2 + $0x4c] sm:$0xf]
        %v488 = vld [vmem:[#allocation2 + $0x50] sm:$0xf]
        %v489 = vld [vmem:[#allocation2 + $0x54] sm:$0xf]
        %v490 = vld [vmem:[#allocation2 + $0x58] sm:$0xf]
        %v491 = vld [vmem:[#allocation2 + $0x5c] sm:$0xf]
        %v492 = vld [vmem:[#allocation2 + $0x60] sm:$0xf]
        %v493 = vld [vmem:[#allocation2 + $0x64] sm:$0xf]
        %v494 = vld [vmem:[#allocation2 + $0x68] sm:$0xf]
        %v495 = vld [vmem:[#allocation2 + $0x6c] sm:$0xf]
        %v496 = vld [vmem:[#allocation2 + $0x70] sm:$0xf]
        %v497 = vld [vmem:[#allocation2 + $0x74] sm:$0xf]
        %v498 = vld [vmem:[#allocation2 + $0x78] sm:$0xf]
        %v499 = vld [vmem:[#allocation2 + $0x7c] sm:$0xf]
        %v500 = vld [vmem:[#allocation2 + $0x80] sm:$0xf]
        %v501 = vld [vmem:[#allocation2 + $0x84] sm:$0xf]
        %v502 = vld [vmem:[#allocation2 + $0x88] sm:$0xf]
        %v503 = vld [vmem:[#allocation2 + $0x8c] sm:$0xf]
        %v504 = vld [vmem:[#allocation2 + $0x90] sm:$0xf]
        %v505 = vld [vmem:[#allocation2 + $0x94] sm:$0xf]
        %v506 = vld [vmem:[#allocation2 + $0x98] sm:$0xf]
        %v507 = vld [vmem:[#allocation2 + $0x9c] sm:$0xf]
        %v508 = vld [vmem:[#allocation2 + $0xa0] sm:$0xf]
        %v509 = vld [vmem:[#allocation2 + $0xa4] sm:$0xf]
        %v510 = vld [vmem:[#allocation2 + $0xa8] sm:$0xf]
        %v511 = vld [vmem:[#allocation2 + $0xac] sm:$0xf]
        %v512 = vld [vmem:[#allocation2 + $0xb0] sm:$0xf]
        %v513 = vld [vmem:[#allocation2 + $0xb4] sm:$0xf]
        %v514 = vld [vmem:[#allocation2 + $0xb8] sm:$0xf]
        %v515 = vld [vmem:[#allocation2 + $0xbc] sm:$0xf]
        %v516 = vld [vmem:[#allocation2 + $0xc0] sm:$0xf]
        %v517 = vld [vmem:[#allocation2 + $0xc4] sm:$0xf]
        %v518 = vld [vmem:[#allocation2 + $0xc8] sm:$0xf]
        %v519 = vld [vmem:[#allocation2 + $0xcc] sm:$0xf]
        %v520 = vld [vmem:[#allocation2 + $0xd0] sm:$0xf]
        %v521 = vld [vmem:[#allocation2 + $0xd4] sm:$0xf]
        %v522 = vld [vmem:[#allocation2 + $0xd8] sm:$0xf]
        %v523 = vld [vmem:[#allocation2 + $0xdc] sm:$0xf]
        %v524 = vld [vmem:[#allocation2 + $0xe0] sm:$0xf]
        %v525 = vld [vmem:[#allocation2 + $0xe4] sm:$0xf]
        %v526 = vld [vmem:[#allocation2 + $0xe8] sm:$0xf]
        %v527 = vld [vmem:[#allocation2 + $0xec] sm:$0xf]
        %v528 = vld [vmem:[#allocation2 + $0xf0] sm:$0xf]
        %v529 = vld [vmem:[#allocation2 + $0xf4] sm:$0xf]
        %v530 = vld [vmem:[#allocation2 + $0xf8] sm:$0xf]
        %v531 = vld [vmem:[#allocation2 + $0xfc] sm:$0xf]
        %v532 = vld [vmem:[#allocation2 + $0x100] sm:$0xf]
        %v533 = vld [vmem:[#allocation2 + $0x104] sm:$0xf]
        %v534 = vld [vmem:[#allocation2 + $0x108] sm:$0xf]
        %v535 = vld [vmem:[#allocation2 + $0x10c] sm:$0xf]
        %v536 = vld [vmem:[#allocation2 + $0x110] sm:$0xf]
        %v537 = vld [vmem:[#allocation2 + $0x114] sm:$0xf]
        %v538 = vld [vmem:[#allocation2 + $0x118] sm:$0xf]
        %v539 = vld [vmem:[#allocation2 + $0x11c] sm:$0xf]
        %v540 = vld [vmem:[#allocation2 + $0x120] sm:$0xf]
        %v541 = vld [vmem:[#allocation2 + $0x124] sm:$0xf]
        %v542 = vld [vmem:[#allocation2 + $0x128] sm:$0xf]
        %v543 = vld [vmem:[#allocation2 + $0x12c] sm:$0xf]
        %v544 = vld [vmem:[#allocation2 + $0x130] sm:$0xf]
        %v545 = vld [vmem:[#allocation2 + $0x134] sm:$0xf]
        %v546 = vld [vmem:[#allocation2 + $0x138] sm:$0xf]
        %v547 = vld [vmem:[#allocation2 + $0x13c] sm:$0xf]
        %v548 = vld [vmem:[#allocation2 + $0x140] sm:$0xf]
        %v549 = vld [vmem:[#allocation2 + $0x144] sm:$0xf]
        %v550 = vld [vmem:[#allocation2 + $0x148] sm:$0xf]
        %v551 = vld [vmem:[#allocation2 + $0x14c] sm:$0xf]
        %v552 = vld [vmem:[#allocation2 + $0x150] sm:$0xf]
        %v553 = vld [vmem:[#allocation2 + $0x154] sm:$0xf]
        %v554 = vld [vmem:[#allocation2 + $0x158] sm:$0xf]
        %v555 = vld [vmem:[#allocation2 + $0x15c] sm:$0xf]
        %v556 = vld [vmem:[#allocation2 + $0x160] sm:$0xf]
        %v557 = vld [vmem:[#allocation2 + $0x164] sm:$0xf]
        %v558 = vld [vmem:[#allocation2 + $0x168] sm:$0xf]
        %v559 = vld [vmem:[#allocation2 + $0x16c] sm:$0xf]
        %v560 = vld [vmem:[#allocation2 + $0x170] sm:$0xf]
        %v561 = vld [vmem:[#allocation2 + $0x174] sm:$0xf]
        %v562 = vld [vmem:[#allocation2 + $0x178] sm:$0xf]
        %v563 = vld [vmem:[#allocation2 + $0x17c] sm:$0xf]
        %v564 = vld [vmem:[#allocation2 + $0x180] sm:$0xf]
        %v565 = vld [vmem:[#allocation2 + $0x184] sm:$0xf]
        %v566 = vld [vmem:[#allocation2 + $0x188] sm:$0xf]
        %v567 = vld [vmem:[#allocation2 + $0x18c] sm:$0xf]
        %v568 = vld [vmem:[#allocation2 + $0x190] sm:$0xf]
        %v569 = vld [vmem:[#allocation2 + $0x194] sm:$0xf]
        %v570 = vld [vmem:[#allocation2 + $0x198] sm:$0xf]
        %v571 = vld [vmem:[#allocation2 + $0x19c] sm:$0xf]
        %v572 = vld [vmem:[#allocation2 + $0x1a0] sm:$0xf]
        %v573 = vld [vmem:[#allocation2 + $0x1a4] sm:$0xf]
        %v574 = vld [vmem:[#allocation2 + $0x1a8] sm:$0xf]
        %v575 = vld [vmem:[#allocation2 + $0x1ac] sm:$0xf]
        %v576 = vld [vmem:[#allocation2 + $0x1b0] sm:$0xf]
        %v577 = vld [vmem:[#allocation2 + $0x1b4] sm:$0xf]
        %v578 = vld [vmem:[#allocation2 + $0x1b8] sm:$0xf]
        %v579 = vld [vmem:[#allocation2 + $0x1bc] sm:$0xf]
        %v580 = vld [vmem:[#allocation2 + $0x1c0] sm:$0xf]
        %v581 = vld [vmem:[#allocation2 + $0x1c4] sm:$0xf]
        %v582 = vld [vmem:[#allocation2 + $0x1c8] sm:$0xf]
        %v583 = vld [vmem:[#allocation2 + $0x1cc] sm:$0xf]
        %v584 = vld [vmem:[#allocation2 + $0x1d0] sm:$0xf]
        %v585 = vld [vmem:[#allocation2 + $0x1d4] sm:$0xf]
        %v586 = vld [vmem:[#allocation2 + $0x1d8] sm:$0xf]
        %v587 = vld [vmem:[#allocation2 + $0x1dc] sm:$0xf]
        %v588 = vld [vmem:[#allocation2 + $0x1e0] sm:$0xf]
        %v589 = vld [vmem:[#allocation2 + $0x1e4] sm:$0xf]
        %v590 = vld [vmem:[#allocation2 + $0x1e8] sm:$0xf]
        %v591 = vld [vmem:[#allocation2 + $0x1ec] sm:$0xf]
        %v592 = vld [vmem:[#allocation2 + $0x1f0] sm:$0xf]
        %v593 = vld [vmem:[#allocation2 + $0x1f4] sm:$0xf]
        %v594 = vld [vmem:[#allocation2 + $0x1f8] sm:$0xf]
        %v595 = vld [vmem:[#allocation2 + $0x1fc] sm:$0xf]
        %v596 = vld [vmem:[#allocation2 + $0x200] sm:$0xf]
        %v597 = vld [vmem:[#allocation2 + $0x204] sm:$0xf]
        %v598 = vld [vmem:[#allocation2 + $0x208] sm:$0xf]
        %v599 = vld [vmem:[#allocation2 + $0x20c] sm:$0xf]
        %v600 = vld [vmem:[#allocation2 + $0x210] sm:$0xf]
        %v601 = vld [vmem:[#allocation2 + $0x214] sm:$0xf]
        %v602 = vld [vmem:[#allocation2 + $0x218] sm:$0xf]
        %v603 = vld [vmem:[#allocation2 + $0x21c] sm:$0xf]
        %v604 = vld [vmem:[#allocation2 + $0x220] sm:$0xf]
        %v605 = vld [vmem:[#allocation2 + $0x224] sm:$0xf]
        %v606 = vld [vmem:[#allocation2 + $0x228] sm:$0xf]
        %v607 = vld [vmem:[#allocation2 + $0x22c] sm:$0xf]
        %v608 = vld [vmem:[#allocation2 + $0x230] sm:$0xf]
        %v609 = vld [vmem:[#allocation2 + $0x234] sm:$0xf]
        %v610 = vld [vmem:[#allocation2 + $0x238] sm:$0xf]
        %v611 = vld [vmem:[#allocation2 + $0x23c] sm:$0xf]
        %v756 = vunpack.c.l.b16 %v468
        %v757 = vunpack.c.l.b16 %v469
        %v758 = vunpack.c.l.b16 %v470
        %v759 = vunpack.c.l.b16 %v471
        %v760 = vunpack.c.l.b16 %v472
        %v761 = vunpack.c.l.b16 %v473
        %v762 = vunpack.c.l.b16 %v474
        %v763 = vunpack.c.l.b16 %v475
        %v764 = vunpack.c.l.b16 %v476
        %v765 = vunpack.c.l.b16 %v477
        %v766 = vunpack.c.l.b16 %v478
        %v767 = vunpack.c.l.b16 %v479
        %v768 = vunpack.c.l.b16 %v480
        %v769 = vunpack.c.l.b16 %v481
        %v770 = vunpack.c.l.b16 %v482
        %v771 = vunpack.c.l.b16 %v483
        %v772 = vunpack.c.l.b16 %v484
        %v773 = vunpack.c.l.b16 %v485
        %v774 = vunpack.c.l.b16 %v486
        %v775 = vunpack.c.l.b16 %v487
        %v776 = vunpack.c.l.b16 %v488
        %v777 = vunpack.c.l.b16 %v489
        %v778 = vunpack.c.l.b16 %v490
        %v779 = vunpack.c.l.b16 %v491
        %v780 = vunpack.c.l.b16 %v492
        %v781 = vunpack.c.l.b16 %v493
        %v782 = vunpack.c.l.b16 %v494
        %v783 = vunpack.c.l.b16 %v495
        %v784 = vunpack.c.l.b16 %v496
        %v785 = vunpack.c.l.b16 %v497
        %v786 = vunpack.c.l.b16 %v498
        %v787 = vunpack.c.l.b16 %v499
        %v788 = vunpack.c.l.b16 %v500
        %v789 = vunpack.c.l.b16 %v501
        %v790 = vunpack.c.l.b16 %v502
        %v791 = vunpack.c.l.b16 %v503
        %v792 = vunpack.c.l.b16 %v504
        %v793 = vunpack.c.l.b16 %v505
        %v794 = vunpack.c.l.b16 %v506
        %v795 = vunpack.c.l.b16 %v507
        %v796 = vunpack.c.l.b16 %v508
        %v797 = vunpack.c.l.b16 %v509
        %v798 = vunpack.c.l.b16 %v510
        %v799 = vunpack.c.l.b16 %v511
        %v800 = vunpack.c.l.b16 %v512
        %v801 = vunpack.c.l.b16 %v513
        %v802 = vunpack.c.l.b16 %v514
        %v803 = vunpack.c.l.b16 %v515
        %v804 = vunpack.c.l.b16 %v516
        %v805 = vunpack.c.l.b16 %v517
        %v806 = vunpack.c.l.b16 %v518
        %v807 = vunpack.c.l.b16 %v519
        %v808 = vunpack.c.l.b16 %v520
        %v809 = vunpack.c.l.b16 %v521
        %v810 = vunpack.c.l.b16 %v522
        %v811 = vunpack.c.l.b16 %v523
        %v812 = vunpack.c.l.b16 %v524
        %v813 = vunpack.c.l.b16 %v525
        %v814 = vunpack.c.l.b16 %v526
        %v815 = vunpack.c.l.b16 %v527
        %v816 = vunpack.c.l.b16 %v528
        %v817 = vunpack.c.l.b16 %v529
        %v818 = vunpack.c.l.b16 %v530
        %v819 = vunpack.c.l.b16 %v531
        %v820 = vunpack.c.l.b16 %v532
        %v821 = vunpack.c.l.b16 %v533
        %v822 = vunpack.c.l.b16 %v534
        %v823 = vunpack.c.l.b16 %v535
        %v824 = vunpack.c.l.b16 %v536
        %v825 = vunpack.c.l.b16 %v537
        %v826 = vunpack.c.l.b16 %v538
        %v827 = vunpack.c.l.b16 %v539
        %v828 = vunpack.c.l.b16 %v540
        %v829 = vunpack.c.l.b16 %v541
        %v830 = vunpack.c.l.b16 %v542
        %v831 = vunpack.c.l.b16 %v543
        %v832 = vunpack.c.l.b16 %v544
        %v833 = vunpack.c.l.b16 %v545
        %v834 = vunpack.c.l.b16 %v546
        %v835 = vunpack.c.l.b16 %v547
        %v836 = vunpack.c.l.b16 %v548
        %v837 = vunpack.c.l.b16 %v549
        %v838 = vunpack.c.l.b16 %v550
        %v839 = vunpack.c.l.b16 %v551
        %v840 = vunpack.c.l.b16 %v552
        %v841 = vunpack.c.l.b16 %v553
        %v842 = vunpack.c.l.b16 %v554
        %v843 = vunpack.c.l.b16 %v555
        %v844 = vunpack.c.l.b16 %v556
        %v845 = vunpack.c.l.b16 %v557
        %v846 = vunpack.c.l.b16 %v558
        %v847 = vunpack.c.l.b16 %v559
        %v848 = vunpack.c.l.b16 %v560
        %v849 = vunpack.c.l.b16 %v561
        %v850 = vunpack.c.l.b16 %v562
        %v851 = vunpack.c.l.b16 %v563
        %v852 = vunpack.c.l.b16 %v564
        %v853 = vunpack.c.l.b16 %v565
        %v854 = vunpack.c.l.b16 %v566
        %v855 = vunpack.c.l.b16 %v567
        %v856 = vunpack.c.l.b16 %v568
        %v857 = vunpack.c.l.b16 %v569
        %v858 = vunpack.c.l.b16 %v570
        %v859 = vunpack.c.l.b16 %v571
        %v860 = vunpack.c.l.b16 %v572
        %v861 = vunpack.c.l.b16 %v573
        %v862 = vunpack.c.l.b16 %v574
        %v863 = vunpack.c.l.b16 %v575
        %v864 = vunpack.c.l.b16 %v576
        %v865 = vunpack.c.l.b16 %v577
        %v866 = vunpack.c.l.b16 %v578
        %v867 = vunpack.c.l.b16 %v579
        %v868 = vunpack.c.l.b16 %v580
        %v869 = vunpack.c.l.b16 %v581
        %v870 = vunpack.c.l.b16 %v582
        %v871 = vunpack.c.l.b16 %v583
        %v872 = vunpack.c.l.b16 %v584
        %v873 = vunpack.c.l.b16 %v585
        %v874 = vunpack.c.l.b16 %v586
        %v875 = vunpack.c.l.b16 %v587
        %v876 = vunpack.c.l.b16 %v588
        %v877 = vunpack.c.l.b16 %v589
        %v878 = vunpack.c.l.b16 %v590
        %v879 = vunpack.c.l.b16 %v591
        %v880 = vunpack.c.l.b16 %v592
        %v881 = vunpack.c.l.b16 %v593
        %v882 = vunpack.c.l.b16 %v594
        %v883 = vunpack.c.l.b16 %v595
        %v884 = vunpack.c.l.b16 %v596
        %v885 = vunpack.c.l.b16 %v597
        %v886 = vunpack.c.l.b16 %v598
        %v887 = vunpack.c.l.b16 %v599
        %v888 = vunpack.c.l.b16 %v600
        %v889 = vunpack.c.l.b16 %v601
        %v890 = vunpack.c.l.b16 %v602
        %v891 = vunpack.c.l.b16 %v603
        %v892 = vunpack.c.l.b16 %v604
        %v893 = vunpack.c.l.b16 %v605
        %v894 = vunpack.c.l.b16 %v606
        %v895 = vunpack.c.l.b16 %v607
        %v896 = vunpack.c.l.b16 %v608
        %v897 = vunpack.c.l.b16 %v609
        %v898 = vunpack.c.l.b16 %v610
        %v899 = vunpack.c.l.b16 %v611
        %v900 = vpack.c.b16 %v757, %v756
        %v901 = vpack.c.b16 %v759, %v758
        %v902 = vpack.c.b16 %v761, %v760
        %v903 = vpack.c.b16 %v763, %v762
        %v904 = vpack.c.b16 %v765, %v764
        %v905 = vpack.c.b16 %v767, %v766
        %v906 = vpack.c.b16 %v769, %v768
        %v907 = vpack.c.b16 %v771, %v770
        %v908 = vpack.c.b16 %v773, %v772
        %v909 = vpack.c.b16 %v775, %v774
        %v910 = vpack.c.b16 %v777, %v776
        %v911 = vpack.c.b16 %v779, %v778
        %v912 = vpack.c.b16 %v781, %v780
        %v913 = vpack.c.b16 %v783, %v782
        %v914 = vpack.c.b16 %v785, %v784
        %v915 = vpack.c.b16 %v787, %v786
        %v916 = vpack.c.b16 %v789, %v788
        %v917 = vpack.c.b16 %v791, %v790
        %v918 = vpack.c.b16 %v793, %v792
        %v919 = vpack.c.b16 %v795, %v794
        %v920 = vpack.c.b16 %v797, %v796
        %v921 = vpack.c.b16 %v799, %v798
        %v922 = vpack.c.b16 %v801, %v800
        %v923 = vpack.c.b16 %v803, %v802
        %v924 = vpack.c.b16 %v805, %v804
        %v925 = vpack.c.b16 %v807, %v806
        %v926 = vpack.c.b16 %v809, %v808
        %v927 = vpack.c.b16 %v811, %v810
        %v928 = vpack.c.b16 %v813, %v812
        %v929 = vpack.c.b16 %v815, %v814
        %v930 = vpack.c.b16 %v817, %v816
        %v931 = vpack.c.b16 %v819, %v818
        %v932 = vpack.c.b16 %v821, %v820
        %v933 = vpack.c.b16 %v823, %v822
        %v934 = vpack.c.b16 %v825, %v824
        %v935 = vpack.c.b16 %v827, %v826
        %v936 = vpack.c.b16 %v829, %v828
        %v937 = vpack.c.b16 %v831, %v830
        %v938 = vpack.c.b16 %v833, %v832
        %v939 = vpack.c.b16 %v835, %v834
        %v940 = vpack.c.b16 %v837, %v836
        %v941 = vpack.c.b16 %v839, %v838
        %v942 = vpack.c.b16 %v841, %v840
        %v943 = vpack.c.b16 %v843, %v842
        %v944 = vpack.c.b16 %v845, %v844
        %v945 = vpack.c.b16 %v847, %v846
        %v946 = vpack.c.b16 %v849, %v848
        %v947 = vpack.c.b16 %v851, %v850
        %v948 = vpack.c.b16 %v853, %v852
        %v949 = vpack.c.b16 %v855, %v854
        %v950 = vpack.c.b16 %v857, %v856
        %v951 = vpack.c.b16 %v859, %v858
        %v952 = vpack.c.b16 %v861, %v860
        %v953 = vpack.c.b16 %v863, %v862
        %v954 = vpack.c.b16 %v865, %v864
        %v955 = vpack.c.b16 %v867, %v866
        %v956 = vpack.c.b16 %v869, %v868
        %v957 = vpack.c.b16 %v871, %v870
        %v958 = vpack.c.b16 %v873, %v872
        %v959 = vpack.c.b16 %v875, %v874
        %v960 = vpack.c.b16 %v877, %v876
        %v961 = vpack.c.b16 %v879, %v878
        %v962 = vpack.c.b16 %v881, %v880
        %v963 = vpack.c.b16 %v883, %v882
        %v964 = vpack.c.b16 %v885, %v884
        %v965 = vpack.c.b16 %v887, %v886
        %v966 = vpack.c.b16 %v889, %v888
        %v967 = vpack.c.b16 %v891, %v890
        %v968 = vpack.c.b16 %v893, %v892
        %v969 = vpack.c.b16 %v895, %v894
        %v970 = vpack.c.b16 %v897, %v896
        %v971 = vpack.c.b16 %v899, %v898
        %1044 = vmatprep.subr.bf16.mxu0 0
        %1045 = vmatpush1.bf16.msra.mxu0 %v907
        %1046 = vmatprep.subr.bf16.mxu0 0
        %1047 = vmatpush1.bf16.msra.mxu0 %v906
        %1048 = vmatprep.subr.bf16.mxu0 0
        %1049 = vmatpush1.bf16.msra.mxu0 %v905
        %1050 = vmatprep.subr.bf16.mxu0 0
        %1051 = vmatpush1.bf16.msra.mxu0 %v904
        %1052 = vmatprep.subr.bf16.mxu0 0
        %1053 = vmatpush1.bf16.msra.mxu0 %v903
        %1054 = vmatprep.subr.bf16.mxu0 0
        %1055 = vmatpush1.bf16.msra.mxu0 %v902
        %1056 = vmatprep.subr.bf16.mxu0 0
        %1057 = vmatpush1.bf16.msra.mxu0 %v901
        %1058 = vmatprep.subr.bf16.mxu0 0
        %1059 = vmatpush1.bf16.msra.mxu0 %v900
        %1060 = vmatprep.subr.bf16.mxu0 0
        %1061 = vmatpush2.bf16.msra.mxu0 %v915
        %1062 = vmatprep.subr.bf16.mxu0 0
        %1063 = vmatpush2.bf16.msra.mxu0 %v914
        %1064 = vmatprep.subr.bf16.mxu0 0
        %1065 = vmatpush2.bf16.msra.mxu0 %v913
        %1066 = vmatprep.subr.bf16.mxu0 0
        %1067 = vmatpush2.bf16.msra.mxu0 %v912
        %1068 = vmatprep.subr.bf16.mxu0 0
        %1069 = vmatpush2.bf16.msra.mxu0 %v911
        %1070 = vmatprep.subr.bf16.mxu0 0
        %1071 = vmatpush2.bf16.msra.mxu0 %v910
        %1072 = vmatprep.subr.bf16.mxu0 0
        %1073 = vmatpush2.bf16.msra.mxu0 %v909
        %1074 = vmatprep.subr.bf16.mxu0 0
        %1075 = vmatpush2.bf16.msra.mxu0 %v908
        %1076 = vmatprep.mubr.bf16.mxu0 %v392
        %1077 = vmatmul.mubr.bf16.gmra.mxu0 %v339
        %v1078 = vpop.f32.mrf.mxu0
        %v1079 = vadd.f32 0.0, %v1078
        %v1080 = vpop.f32.mrf.mxu0
        %v1081 = vpop.f32.mrf.mxu0
        %v1082 = vadd.f32 0.0, %v1081
        %v1083 = vpop.f32.mrf.mxu0
        %1084 = vmatprep.mubr.bf16.mxu0 %v393
        %1085 = vmatmul.mubr.bf16.gmra.mxu0 %v340
        %v1086 = vpop.f32.mrf.mxu0
        %v1087 = vadd.f32 0.0, %v1086
        %v1088 = vpop.f32.mrf.mxu0
        %v1089 = vpop.f32.mrf.mxu0
        %v1090 = vadd.f32 0.0, %v1089
        %v1091 = vpop.f32.mrf.mxu0
        %1092 = vmatprep.mubr.bf16.mxu0 %v394
        %1093 = vmatmul.mubr.bf16.gmra.mxu0 %v341
        %v1094 = vpop.f32.mrf.mxu0
        %v1095 = vadd.f32 0.0, %v1094
        %v1096 = vpop.f32.mrf.mxu0
        %v1097 = vpop.f32.mrf.mxu0
        %v1098 = vadd.f32 0.0, %v1097
        %v1099 = vpop.f32.mrf.mxu0
        %1100 = vmatprep.mubr.bf16.mxu0 %v395
        %1101 = vmatmul.mubr.bf16.gmra.mxu0 %v342
        %v1102 = vpop.f32.mrf.mxu0
        %v1103 = vadd.f32 0.0, %v1102
        %v1104 = vpop.f32.mrf.mxu0
        %v1105 = vpop.f32.mrf.mxu0
        %v1106 = vadd.f32 0.0, %v1105
        %v1107 = vpop.f32.mrf.mxu0
        %1108 = vdwg.mxu0
        %1109 = vmatprep.subr.bf16.mxu0 0
        %1110 = vmatpush1.bf16.msra.mxu0 %v923
        %1111 = vmatprep.subr.bf16.mxu0 0
        %1112 = vmatpush1.bf16.msra.mxu0 %v922
        %1113 = vmatprep.subr.bf16.mxu0 0
        %1114 = vmatpush1.bf16.msra.mxu0 %v921
        %1115 = vmatprep.subr.bf16.mxu0 0
        %1116 = vmatpush1.bf16.msra.mxu0 %v920
        %1117 = vmatprep.subr.bf16.mxu0 0
        %1118 = vmatpush1.bf16.msra.mxu0 %v919
        %1119 = vmatprep.subr.bf16.mxu0 0
        %1120 = vmatpush1.bf16.msra.mxu0 %v918
        %1121 = vmatprep.subr.bf16.mxu0 0
        %1122 = vmatpush1.bf16.msra.mxu0 %v917
        %1123 = vmatprep.subr.bf16.mxu0 0
        %1124 = vmatpush1.bf16.msra.mxu0 %v916
        %1125 = vmatprep.subr.bf16.mxu0 0
        %1126 = vmatpush2.bf16.msra.mxu0 %v931
        %1127 = vmatprep.subr.bf16.mxu0 0
        %1128 = vmatpush2.bf16.msra.mxu0 %v930
        %1129 = vmatprep.subr.bf16.mxu0 0
        %1130 = vmatpush2.bf16.msra.mxu0 %v929
        %1131 = vmatprep.subr.bf16.mxu0 0
        %1132 = vmatpush2.bf16.msra.mxu0 %v928
        %1133 = vmatprep.subr.bf16.mxu0 0
        %1134 = vmatpush2.bf16.msra.mxu0 %v927
        %1135 = vmatprep.subr.bf16.mxu0 0
        %1136 = vmatpush2.bf16.msra.mxu0 %v926
        %1137 = vmatprep.subr.bf16.mxu0 0
        %1138 = vmatpush2.bf16.msra.mxu0 %v925
        %1139 = vmatprep.subr.bf16.mxu0 0
        %1140 = vmatpush2.bf16.msra.mxu0 %v924
        %1141 = vmatprep.mubr.bf16.mxu0 %v433
        %1142 = vmatmul.mubr.bf16.gmra.mxu0 %v429
        %v1143 = vpop.f32.mrf.mxu0
        %v1144 = vadd.f32 %v1079, %v1143
        %v1145 = vpop.f32.mrf.mxu0
        %v1146 = vpop.f32.mrf.mxu0
        %v1147 = vadd.f32 %v1082, %v1146
        %v1148 = vpop.f32.mrf.mxu0
        %1149 = vmatprep.mubr.bf16.mxu0 %v434
        %1150 = vmatmul.mubr.bf16.gmra.mxu0 %v430
        %v1151 = vpop.f32.mrf.mxu0
        %v1152 = vadd.f32 %v1087, %v1151
        %v1153 = vpop.f32.mrf.mxu0
        %v1154 = vpop.f32.mrf.mxu0
        %v1155 = vadd.f32 %v1090, %v1154
        %v1156 = vpop.f32.mrf.mxu0
        %1157 = vmatprep.mubr.bf16.mxu0 %v435
        %1158 = vmatmul.mubr.bf16.gmra.mxu0 %v431
        %v1159 = vpop.f32.mrf.mxu0
        %v1160 = vadd.f32 %v1095, %v1159
        %v1161 = vpop.f32.mrf.mxu0
        %v1162 = vpop.f32.mrf.mxu0
        %v1163 = vadd.f32 %v1098, %v1162
        %v1164 = vpop.f32.mrf.mxu0
        %1165 = vmatprep.mubr.bf16.mxu0 %v436
        %1166 = vmatmul.mubr.bf16.gmra.mxu0 %v432
        %v1167 = vpop.f32.mrf.mxu0
        %v1168 = vadd.f32 %v1103, %v1167
        %v1169 = vpop.f32.mrf.mxu0
        %v1170 = vpop.f32.mrf.mxu0
        %v1171 = vadd.f32 %v1106, %v1170
        %v1172 = vpop.f32.mrf.mxu0
        %1173 = vdwg.mxu0
        %1174 = vmatprep.subr.bf16.mxu0 0
        %1175 = vmatpush1.bf16.msra.mxu0 %v939
        %1176 = vmatprep.subr.bf16.mxu0 0
        %1177 = vmatpush1.bf16.msra.mxu0 %v938
        %1178 = vmatprep.subr.bf16.mxu0 0
        %1179 = vmatpush1.bf16.msra.mxu0 %v937
        %1180 = vmatprep.subr.bf16.mxu0 0
        %1181 = vmatpush1.bf16.msra.mxu0 %v936
        %1182 = vmatprep.subr.bf16.mxu0 0
        %1183 = vmatpush1.bf16.msra.mxu0 %v935
        %1184 = vmatprep.subr.bf16.mxu0 0
        %1185 = vmatpush1.bf16.msra.mxu0 %v934
        %1186 = vmatprep.subr.bf16.mxu0 0
        %1187 = vmatpush1.bf16.msra.mxu0 %v933
        %1188 = vmatprep.subr.bf16.mxu0 0
        %1189 = vmatpush1.bf16.msra.mxu0 %v932
        %1190 = vmatprep.subr.bf16.mxu0 0
        %1191 = vmatpush2.bf16.msra.mxu0 %v947
        %1192 = vmatprep.subr.bf16.mxu0 0
        %1193 = vmatpush2.bf16.msra.mxu0 %v946
        %1194 = vmatprep.subr.bf16.mxu0 0
        %1195 = vmatpush2.bf16.msra.mxu0 %v945
        %1196 = vmatprep.subr.bf16.mxu0 0
        %1197 = vmatpush2.bf16.msra.mxu0 %v944
        %1198 = vmatprep.subr.bf16.mxu0 0
        %1199 = vmatpush2.bf16.msra.mxu0 %v943
        %1200 = vmatprep.subr.bf16.mxu0 0
        %1201 = vmatpush2.bf16.msra.mxu0 %v942
        %1202 = vmatprep.subr.bf16.mxu0 0
        %1203 = vmatpush2.bf16.msra.mxu0 %v941
        %1204 = vmatprep.subr.bf16.mxu0 0
        %1205 = vmatpush2.bf16.msra.mxu0 %v940
        %1206 = vmatprep.mubr.bf16.mxu0 %v451
        %1207 = vmatmul.mubr.bf16.gmra.mxu0 %v443
        %v1208 = vpop.f32.mrf.mxu0
        %v1209 = vadd.f32 %v1144, %v1208
        %v1210 = vpop.f32.mrf.mxu0
        %v1211 = vpop.f32.mrf.mxu0
        %v1212 = vadd.f32 %v1147, %v1211
        %v1213 = vpop.f32.mrf.mxu0
        %1214 = vmatprep.mubr.bf16.mxu0 %v452
        %1215 = vmatmul.mubr.bf16.gmra.mxu0 %v444
        %v1216 = vpop.f32.mrf.mxu0
        %v1217 = vadd.f32 %v1152, %v1216
        %v1218 = vpop.f32.mrf.mxu0
        %v1219 = vpop.f32.mrf.mxu0
        %v1220 = vadd.f32 %v1155, %v1219
        %v1221 = vpop.f32.mrf.mxu0
        %1222 = vmatprep.mubr.bf16.mxu0 %v453
        %1223 = vmatmul.mubr.bf16.gmra.mxu0 %v445
        %v1224 = vpop.f32.mrf.mxu0
        %v1225 = vadd.f32 %v1160, %v1224
        %v1226 = vpop.f32.mrf.mxu0
        %v1227 = vpop.f32.mrf.mxu0
        %v1228 = vadd.f32 %v1163, %v1227
        %v1229 = vpop.f32.mrf.mxu0
        %1230 = vmatprep.mubr.bf16.mxu0 %v454
        %1231 = vmatmul.mubr.bf16.gmra.mxu0 %v446
        %v1232 = vpop.f32.mrf.mxu0
        %v1233 = vadd.f32 %v1168, %v1232
        %v1234 = vpop.f32.mrf.mxu0
        %v1235 = vpop.f32.mrf.mxu0
        %v1236 = vadd.f32 %v1171, %v1235
        %v1237 = vpop.f32.mrf.mxu0
        %1238 = vdwg.mxu0
        %1239 = vmatprep.subr.bf16.mxu0 0
        %1240 = vmatpush1.bf16.msra.mxu0 %v955
        %1241 = vmatprep.subr.bf16.mxu0 0
        %1242 = vmatpush1.bf16.msra.mxu0 %v954
        %1243 = vmatprep.subr.bf16.mxu0 0
        %1244 = vmatpush1.bf16.msra.mxu0 %v953
        %1245 = vmatprep.subr.bf16.mxu0 0
        %1246 = vmatpush1.bf16.msra.mxu0 %v952
        %1247 = vmatprep.subr.bf16.mxu0 0
        %1248 = vmatpush1.bf16.msra.mxu0 %v951
        %1249 = vmatprep.subr.bf16.mxu0 0
        %1250 = vmatpush1.bf16.msra.mxu0 %v950
        %1251 = vmatprep.subr.bf16.mxu0 0
        %1252 = vmatpush1.bf16.msra.mxu0 %v949
        %1253 = vmatprep.subr.bf16.mxu0 0
        %1254 = vmatpush1.bf16.msra.mxu0 %v948
        %1255 = vmatprep.subr.bf16.mxu0 0
        %1256 = vmatpush2.bf16.msra.mxu0 %v963
        %1257 = vmatprep.subr.bf16.mxu0 0
        %1258 = vmatpush2.bf16.msra.mxu0 %v962
        %1259 = vmatprep.subr.bf16.mxu0 0
        %1260 = vmatpush2.bf16.msra.mxu0 %v961
        %1261 = vmatprep.subr.bf16.mxu0 0
        %1262 = vmatpush2.bf16.msra.mxu0 %v960
        %1263 = vmatprep.subr.bf16.mxu0 0
        %1264 = vmatpush2.bf16.msra.mxu0 %v959
        %1265 = vmatprep.subr.bf16.mxu0 0
        %1266 = vmatpush2.bf16.msra.mxu0 %v958
        %1267 = vmatprep.subr.bf16.mxu0 0
        %1268 = vmatpush2.bf16.msra.mxu0 %v957
        %1269 = vmatprep.subr.bf16.mxu0 0
        %1270 = vmatpush2.bf16.msra.mxu0 %v956
        %1271 = vmatprep.mubr.bf16.mxu0 %v393
        %1272 = vmatmul.mubr.bf16.gmra.mxu0 %v340
        %v1273 = vpop.f32.mrf.mxu0
        %v1274 = vadd.f32 %v1209, %v1273
        %v1275 = vpop.f32.mrf.mxu0
        %v1276 = vpop.f32.mrf.mxu0
        %v1277 = vadd.f32 %v1212, %v1276
        %v1278 = vpop.f32.mrf.mxu0
        %1279 = vmatprep.mubr.bf16.mxu0 %v394
        %1280 = vmatmul.mubr.bf16.gmra.mxu0 %v341
        %v1281 = vpop.f32.mrf.mxu0
        %v1282 = vadd.f32 %v1217, %v1281
        %v1283 = vpop.f32.mrf.mxu0
        %v1284 = vpop.f32.mrf.mxu0
        %v1285 = vadd.f32 %v1220, %v1284
        %v1286 = vpop.f32.mrf.mxu0
        %1287 = vmatprep.mubr.bf16.mxu0 %v395
        %1288 = vmatmul.mubr.bf16.gmra.mxu0 %v342
        %v1289 = vpop.f32.mrf.mxu0
        %v1290 = vadd.f32 %v1225, %v1289
        %v1291 = vpop.f32.mrf.mxu0
        %v1292 = vpop.f32.mrf.mxu0
        %v1293 = vadd.f32 %v1228, %v1292
        %v1294 = vpop.f32.mrf.mxu0
        %1295 = vmatprep.mubr.bf16.mxu0 %v462
        %1296 = vmatmul.mubr.bf16.gmra.mxu0 %v455
        %v1297 = vpop.f32.mrf.mxu0
        %v1298 = vadd.f32 %v1233, %v1297
        %v1299 = vpop.f32.mrf.mxu0
        %v1300 = vpop.f32.mrf.mxu0
        %v1301 = vadd.f32 %v1236, %v1300
        %v1302 = vpop.f32.mrf.mxu0
        %1303 = vdwg.mxu0
        %1304 = vmatprep.subr.bf16.mxu0 0
        %1305 = vmatpush1.bf16.msra.mxu0 %v971
        %1306 = vmatprep.subr.bf16.mxu0 0
        %1307 = vmatpush1.bf16.msra.mxu0 %v970
        %1308 = vmatprep.subr.bf16.mxu0 0
        %1309 = vmatpush1.bf16.msra.mxu0 %v969
        %1310 = vmatprep.subr.bf16.mxu0 0
        %1311 = vmatpush1.bf16.msra.mxu0 %v968
        %1312 = vmatprep.subr.bf16.mxu0 0
        %1313 = vmatpush1.bf16.msra.mxu0 %v967
        %1314 = vmatprep.subr.bf16.mxu0 0
        %1315 = vmatpush1.bf16.msra.mxu0 %v966
        %1316 = vmatprep.subr.bf16.mxu0 0
        %1317 = vmatpush1.bf16.msra.mxu0 %v965
        %1318 = vmatprep.subr.bf16.mxu0 0
        %1319 = vmatpush1.bf16.msra.mxu0 %v964
        %1320 = vmatprep.subr.bf16.mxu0 0
        %1321 = vmatpush2.bf16.msra.mxu0 0
        %1322 = vmatprep.subr.bf16.mxu0 0
        %1323 = vmatpush2.bf16.msra.mxu0 0
        %1324 = vmatprep.subr.bf16.mxu0 0
        %1325 = vmatpush2.bf16.msra.mxu0 0
        %1326 = vmatprep.subr.bf16.mxu0 0
        %1327 = vmatpush2.bf16.msra.mxu0 0
        %1328 = vmatprep.subr.bf16.mxu0 0
        %1329 = vmatpush2.bf16.msra.mxu0 0
        %1330 = vmatprep.subr.bf16.mxu0 0
        %1331 = vmatpush2.bf16.msra.mxu0 0
        %1332 = vmatprep.subr.bf16.mxu0 0
        %1333 = vmatpush2.bf16.msra.mxu0 0
        %1334 = vmatprep.subr.bf16.mxu0 0
        %1335 = vmatpush2.bf16.msra.mxu0 0
        %1336 = vmatprep.mubr.bf16.mxu0 0
        %1337 = vmatmul.mubr.bf16.gmra.mxu0 %v430
        %v1338 = vpop.f32.mrf.mxu0
        %v1339 = vadd.f32 %v1274, %v1338
        %v1340 = vpop.f32.mrf.mxu0
        %v1341 = vpop.f32.mrf.mxu0
        %v1342 = vadd.f32 %v1277, %v1341
        %v1343 = vpop.f32.mrf.mxu0
        %1344 = vmatprep.mubr.bf16.mxu0 0
        %1345 = vmatmul.mubr.bf16.gmra.mxu0 %v431
        %v1346 = vpop.f32.mrf.mxu0
        %v1347 = vadd.f32 %v1282, %v1346
        %v1348 = vpop.f32.mrf.mxu0
        %v1349 = vpop.f32.mrf.mxu0
        %v1350 = vadd.f32 %v1285, %v1349
        %v1351 = vpop.f32.mrf.mxu0
        %1352 = vmatprep.mubr.bf16.mxu0 0
        %1353 = vmatmul.mubr.bf16.gmra.mxu0 %v432
        %v1354 = vpop.f32.mrf.mxu0
        %v1355 = vadd.f32 %v1290, %v1354
        %v1356 = vpop.f32.mrf.mxu0
        %v1357 = vpop.f32.mrf.mxu0
        %v1358 = vadd.f32 %v1293, %v1357
        %v1359 = vpop.f32.mrf.mxu0
        %1360 = vmatprep.mubr.bf16.mxu0 0
        %1361 = vmatmul.mubr.bf16.gmra.mxu0 %v467
        %v1362 = vpop.f32.mrf.mxu0
        %v1363 = vadd.f32 %v1298, %v1362
        %v1364 = vpop.f32.mrf.mxu0
        %v1365 = vpop.f32.mrf.mxu0
        %v1366 = vadd.f32 %v1301, %v1365
        %v1367 = vpop.f32.mrf.mxu0
        %1368 = vdwg.mxu0
        %v1369 = vld [vmem:[%s3] sm:$0x1]
        %v1371 = vlaneseq
        %v1372 = vshrl.u32 %v1371, 7
        %v1373 = vsub.s32 0, %v1372
        %v1374 = vrot.slane %v1369, %v1373
        %v1376 = vadd.f32 %v1339, %v1374
        %v1377 = vadd.f32 %v1342, %v1374
        %v1378 = vadd.f32 %v1347, %v1374
        %v1379 = vadd.f32 %v1350, %v1374
        %v1380 = vadd.f32 %v1355, %v1374
        %v1381 = vadd.f32 %v1358, %v1374
        %v1382 = vadd.f32 %v1363, %v1374
        %v1383 = vadd.f32 %v1366, %v1374
        %v1384 = vmul.f32 %v1376, 0.5
        %v1385 = vmul.f32 %v1377, 0.5
        %v1386 = vmul.f32 %v1378, 0.5
        %v1387 = vmul.f32 %v1379, 0.5
        %v1388 = vmul.f32 %v1380, 0.5
        %v1389 = vmul.f32 %v1381, 0.5
        %v1390 = vmul.f32 %v1382, 0.5
        %v1391 = vmul.f32 %v1383, 0.5
        %v1408 = vrot.slane %v254, 1
        %v1409 = vrot.slane %v255, 1
        %v1410 = vsel %vm359, %v1408, %v1409
        %v1411 = vrot.slane %v256, 1
        %v1412 = vrot.slane %v257, 1
        %v1413 = vsel %vm359, %v1411, %v1412
        %v1414 = vrot.slane %v258, 1
        %v1415 = vrot.slane %v259, 1
        %v1416 = vsel %vm359, %v1414, %v1415
        %v1417 = vrot.slane %v260, 1
        %v1418 = vrot.slane %v261, 1
        %v1419 = vsel %vm359, %v1417, %v1418
        %v1420 = vrot.slane %v262, 1
        %v1421 = vrot.slane %v263, 1
        %v1422 = vsel %vm359, %v1420, %v1421
        %v1423 = vrot.slane %v264, 1
        %v1424 = vrot.slane %v265, 1
        %v1425 = vsel %vm359, %v1423, %v1424
        %v1426 = vrot.slane %v266, 1
        %v1427 = vrot.slane %v267, 1
        %v1428 = vsel %vm359, %v1426, %v1427
        %v1429 = vrot.slane %v268, 1
        %v1430 = vrot.slane %v269, 1
        %v1431 = vsel %vm359, %v1429, %v1430
        %v1440 = vadd.f32 %v1384, %v1410
        %v1441 = vadd.f32 %v1385, %v1413
        %v1442 = vadd.f32 %v1386, %v1416
        %v1443 = vadd.f32 %v1387, %v1419
        %v1444 = vadd.f32 %v1388, %v1422
        %v1445 = vadd.f32 %v1389, %v1425
        %v1446 = vadd.f32 %v1390, %v1428
        %v1447 = vadd.f32 %v1391, %v1431
        %1448 = vst [vmem:[%s233] sm:$0xff] %v1376
        %1449 = vst [vmem:[%s233 + $0x8] sm:$0xff] %v1377
        %1450 = vst [vmem:[%s233 + $0x10] sm:$0xff] %v1378
        %1451 = vst [vmem:[%s233 + $0x18] sm:$0xff] %v1379
        %1452 = vst [vmem:[%s233 + $0x20] sm:$0xff] %v1380
        %1453 = vst [vmem:[%s233 + $0x28] sm:$0xff] %v1381
        %1454 = vst [vmem:[%s233 + $0x30] sm:$0xff] %v1382
        %1455 = vst [vmem:[%s233 + $0x38] sm:$0xff] %v1383
        %1456 = vst [vmem:[%s250] sm:$0xff] 0.0
        %1457 = vst [vmem:[%s250 + $0x8] sm:$0x3] 0.0
        %1458 = vst [vmem:[%s250 + $0x10] sm:$0xff] 0.0
        %1459 = vst [vmem:[%s250 + $0x18] sm:$0x3] 0.0
        %1460 = vst [vmem:[%s250 + $0x20] sm:$0xff] 0.0
        %1461 = vst [vmem:[%s250 + $0x28] sm:$0x3] 0.0
        %1462 = vst [vmem:[%s250 + $0x30] sm:$0xff] 0.0
        %1463 = vst [vmem:[%s250 + $0x38] sm:$0x3] 0.0
        %1464 = vst [vmem:[%s250 + $0x40] sm:$0xff] 0.0
        %1465 = vst [vmem:[%s250 + $0x48] sm:$0x3] 0.0
        %1466 = vst [vmem:[%s250 + $0x50] sm:$0xff] 0.0
        %1467 = vst [vmem:[%s250 + $0x58] sm:$0x3] 0.0
        %1468 = vst [vmem:[%s250 + $0x60] sm:$0xff] 0.0
        %1469 = vst [vmem:[%s250 + $0x68] sm:$0x3] 0.0
        %1470 = vst [vmem:[%s250 + $0x70] sm:$0xff] 0.0
        %1471 = vst [vmem:[%s250 + $0x78] sm:$0x3] 0.0
        %1472 = vst [vmem:[%s250 + $0x80] sm:$0xff] 0.0
        %1473 = vst [vmem:[%s250 + $0x88] sm:$0x3] 0.0
        %1474 = vst [vmem:[%s250 + $0x90] sm:$0xff] 0.0
        %1475 = vst [vmem:[%s250 + $0x98] sm:$0x3] 0.0
        %s1476 = scalar_lea.vmem %s250, 16
        %1477 = vst [vmem:[%s1476 + $0x1] sm:$0xff] %v1440
        %1478 = vst [vmem:[%s1476 + $0x11] sm:$0xff] %v1441
        %1479 = vst [vmem:[%s1476 + $0x21] sm:$0xff] %v1442
        %1480 = vst [vmem:[%s1476 + $0x31] sm:$0xff] %v1443
        %1481 = vst [vmem:[%s1476 + $0x41] sm:$0xff] %v1444
        %1482 = vst [vmem:[%s1476 + $0x51] sm:$0xff] %v1445
        %1483 = vst [vmem:[%s1476 + $0x61] sm:$0xff] %v1446
        %1484 = vst [vmem:[%s1476 + $0x71] sm:$0xff] %v1447
        %s1485 = sand.u32 %s118, 1
        %s1486 = scalar_lea.sflag [#allocation4], %s1485
        %s1487 = sand.u32 %s118, 1
        %s1488 = smul.addr %s1487, 64
        %s1489 = scalar_lea.vmem [#allocation5], %s1488
        %p1490 = scmp.lt.s32.totalorder %s21, 1
        %s1491 = scalar_select %p1490, %s21, 1
        %s1492 = smul.addr %s1491, 20
        %s1493 = smul.addr %s1492, 8
        %s1494 = scalar_lea.vmem %s5, %s1493
        // Predicated region
        $region41: #{tpu_custom_call.1} parent=35 // pred_check
          %p1495 = pneg %p128
        $region42: #{tpu_custom_call.1} parent=35 // pred_check_branch
          %1497 = sbr.rel (%p1495) target = $region44
        $region43: #{tpu_custom_call.1} parent=35 // pred_region
          %s1499 = ssub.s32 1024, 1024
          %1500 = vsyncadd %s1486, %s1499
          %s1501 = smul.addr %s21, 8
          %s1502 = smul.addr %s1501, 128
          %s1503 = scalar_lea.hbm %s4, %s1502
          %s1504 = sshll.u32 %s1489, 4
          %s1505 = int_to_ptr.vmem [resolvable:$true] %s1504
          %1510 = dma.vmem_to_hbm [thread:$0]  %s1505, 1024, %s1503, %s1486, 128, 128, 8
        $region44: #{tpu_custom_call.1} parent=35 // pred_fallthru
          _
        // Predicated region
        $region45: #{tpu_custom_call.1} parent=35 // pred_check
          %p1511 = pneg %p154
        $region46: #{tpu_custom_call.1} parent=35 // pred_check_branch
          %1513 = sbr.rel (%p1511) target = $region48
        $region47: #{tpu_custom_call.1} parent=35 // pred_region
          _
        $region48: #{tpu_custom_call.1} parent=35 // pred_fallthru
          _
      $region36: #{tpu_custom_call.1} parent=5 // pred_fallthru
        _
      %p1514 = scmp.le.s32.totalorder 2, %s16
      // Predicated region
      $region49: #{tpu_custom_call.1} parent=5 // pred_check
        %p1515 = pneg %p1514
      $region50: #{tpu_custom_call.1} parent=5 // pred_check_branch
        %1517 = sbr.rel (%p1515) target = $region52
      $region51: #{tpu_custom_call.1} parent=5 // pred_region
        %s1518 = ssub.s32 %s16, 2
        // Predicated region
        $region53: #{tpu_custom_call.1} parent=51 // pred_check
          %p1519 = pneg %p134
        $region54: #{tpu_custom_call.1} parent=51 // pred_check_branch
          %1521 = sbr.rel (%p1519) target = $region56
        $region55: #{tpu_custom_call.1} parent=51 // pred_region
          %s1522 = sand.u32 %s119, 1
          %s1523 = scalar_lea.sflag [#allocation4], %s1522
          %s1524 = sand.u32 %s119, 1
          %s1525 = smul.addr %s1524, 64
          %s1526 = scalar_lea.vmem [#allocation5], %s1525
          %1527 = dma.done %s1523, 1024
        $region56: #{tpu_custom_call.1} parent=51 // pred_fallthru
          _
        // Predicated region
        $region57: #{tpu_custom_call.1} parent=51 // pred_check
          %p1528 = pneg %p160
        $region58: #{tpu_custom_call.1} parent=51 // pred_check_branch
          %1530 = sbr.rel (%p1528) target = $region60
        $region59: #{tpu_custom_call.1} parent=51 // pred_region
          %p1531 = scmp.lt.s32.totalorder %s22, 1
          %s1532 = scalar_select %p1531, %s22, 1
          %s1533 = smul.addr %s1532, 20
          %s1534 = smul.addr %s1533, 8
          %s1535 = scalar_lea.vmem %s5, %s1534
        $region60: #{tpu_custom_call.1} parent=51 // pred_fallthru
          _
      $region52: #{tpu_custom_call.1} parent=5 // pred_fallthru
        _
    $region6: #{tpu_custom_call.1} parent=1 // loop_footer
      %s20 = sadd.s32 1, %s16
    $region7: #{tpu_custom_call.1} parent=1 // loop_footer_branch
      %15 = sbr.rel target = $region3
    $region8: #{tpu_custom_call.1} parent=1 // loop_exit
      _
    %1536 = vsyncpa [#allocation3], 1
    %s1537 = scalar_lea.sflag [#allocation3], 1
    %1538 = vsyncpa %s1537, 1
    %1539 = vsyncpa [#allocation4], 1
    %s1540 = scalar_lea.sflag [#allocation4], 1
    %1541 = vsyncpa %s1540, 1

</llo_original>
